<compile_context>
chip_gen: v7x
topology: tpu7x:2x2x1
jax: 0.10.0
libtpu: 0.0.40
codegen_flags: <defaults>
</compile_context>

<pallas_src>
import functools

import jax
import jax.numpy as jnp
from jax import lax
from jax.experimental import pallas as pl
from jax.experimental.pallas import tpu as pltpu

N_EMBD = 128       # n_embd in the PyTorch module
BLOCK_SIZE = 64    # block_size in the PyTorch module (max T)
NUM_HEADS = 4
HEAD_SIZE = N_EMBD // NUM_HEADS   # 32


def mha_kernel(x_ref, wqkv_ref, wp_ref, bp_ref, o_ref, qkv_ref, cat_ref, *,
               num_heads, head_size, seq_len, batch_block):
    """One grid step = `batch_block` batch elements, flattened into M = TB*T rows.

    x_ref    : (TB*T, C)  f32   input slab for this step
    wqkv_ref : (C, 3C)    bf16  fused [Wq*scale | Wk | Wv], x @ W layout
    wp_ref   : (C, C)     bf16  W_proj.T (x @ W layout)
    bp_ref   : (1, C)     f32   proj bias
    o_ref    : (TB*T, C)        output slab
    qkv_ref  : (TB*T, 3C) bf16  VMEM scratch holding the QKV projection
    cat_ref  : (TB*T, C)  bf16  VMEM scratch holding concatenated head outputs
    """
    C = num_heads * head_size
    T = seq_len
    TB = batch_block

    # ---- fused QKV projection: one (TB*T, C) @ (C, 3C) matmul on the MXU ----
    x_bf = x_ref[...].astype(jnp.bfloat16)                          # (M, C)
    qkv = jnp.dot(x_bf, wqkv_ref[...],
                  preferred_element_type=jnp.float32)               # (M, 3C) f32
    # scale is already folded into the Wq columns host-side
    qkv_ref[...] = qkv.astype(jnp.bfloat16)

    # causal (lower-triangular) mask, built once per step
    row = lax.broadcasted_iota(jnp.int32, (T, T), 0)
    col = lax.broadcasted_iota(jnp.int32, (T, T), 1)
    causal = col <= row                                             # (T, T) bool

    # ---- per-(batch, head) attention: (T,T) scores, softmax, PV ----
    for b in range(TB):                                             # static unroll
        r0 = b * T
        for h in range(num_heads):                                  # static unroll
            lo = h * head_size
            hi = lo + head_size
            qh = qkv_ref[r0:r0 + T, lo:hi]                          # (T, hs) bf16
            kh = qkv_ref[r0:r0 + T, C + lo:C + hi]                  # (T, hs) bf16
            vh = qkv_ref[r0:r0 + T, 2 * C + lo:2 * C + hi]          # (T, hs) bf16

            # scores: contract K on its last dim -> no materialized transpose
            s = lax.dot_general(qh, kh, (((1,), (1,)), ((), ())),
                                preferred_element_type=jnp.float32)  # (T, T) f32
            s = jnp.where(causal, s, -jnp.inf)

            # numerically-stable softmax in f32; reciprocal on the EUP slot
            m = jnp.max(s, axis=-1, keepdims=True)
            e = jnp.exp(s - m)
            denom = jnp.sum(e, axis=-1, keepdims=True)
            p = (e * pl.reciprocal(denom, approx=True)).astype(jnp.bfloat16)

            head_out = jnp.dot(p, vh,
                               preferred_element_type=jnp.float32)   # (T, hs) f32
            # lane-offset store into the concat scratch (cheap masked store)
            cat_ref[r0:r0 + T, lo:hi] = head_out.astype(jnp.bfloat16)

    # ---- single fat output projection: (M, C) @ (C, C), then bias ----
    out = jnp.dot(cat_ref[...], wp_ref[...],
                  preferred_element_type=jnp.float32)                # (M, C) f32
    out = out + bp_ref[...]                                          # (1,C) broadcast
    o_ref[...] = out.astype(o_ref.dtype)


def multi_head_attention(x, wqkv_bf, wp_t_bf, bp, *, batch_block=None):
    """x: (B, T, C) f32; wqkv_bf: (C, 3C) bf16; wp_t_bf: (C, C) bf16; bp: (1, C) f32."""
    B, T, C = x.shape

    if batch_block is None:
        # Keep >= 2 "parallel" grid steps so both v7x TensorCores get work;
        # fold the rest of the batch into the matmul M dimension to fatten the
        # MXU shapes and amortize the ~0.35 us/step overhead (v5e/v6e).
        batch_block = B // 2 if (B >= 2 and B % 2 == 0) else 1
    while B % batch_block != 0:
        batch_block -= 1
    grid = B // batch_block
    M_blk = batch_block * T

    kernel = functools.partial(mha_kernel, num_heads=NUM_HEADS,
                               head_size=HEAD_SIZE, seq_len=T,
                               batch_block=batch_block)

    # Present activations as a lane-dense (B*T, C) slab (free reshape in XLA).
    x2 = x.reshape(B * T, C)

    out = pl.pallas_call(
        kernel,
        out_shape=jax.ShapeDtypeStruct((B * T, C), x.dtype),
        grid_spec=pltpu.PrefetchScalarGridSpec(
            num_scalar_prefetch=0,
            grid=(grid,),
            in_specs=[
                pl.BlockSpec((M_blk, C), lambda i: (i, 0)),
                pl.BlockSpec((C, 3 * C), lambda i: (0, 0)),
                pl.BlockSpec((C, C), lambda i: (0, 0)),
                pl.BlockSpec((1, C), lambda i: (0, 0)),
            ],
            out_specs=pl.BlockSpec((M_blk, C), lambda i: (i, 0)),
            scratch_shapes=[
                pltpu.VMEM((M_blk, 3 * C), jnp.bfloat16),   # QKV projection
                pltpu.VMEM((M_blk, C), jnp.bfloat16),       # concat head outputs
            ],
        ),
        compiler_params=pltpu.CompilerParams(
            dimension_semantics=("parallel",)),
    )(x2, wqkv_bf, wp_t_bf, bp)

    return out.reshape(B, T, C)


def prepare_params(wq, wk, wv, wp_t, bp):
    """Host-side, one-time prep into the kernel's fused bf16 layout.

    wq/wk/wv : (H, C, hs) per-head weights (x @ W layout)
    wp_t     : (C, C) = W_proj.T
    bp       : (1, C) proj bias
    Returns (wqkv_bf16 with scale folded into Wq, wp_t_bf16, bp_f32).
    """
    H, C, hs = wq.shape
    scale = float(C) ** (-0.5)   # n_embd**-0.5, matching the PyTorch reference

    def flat(w):
        return jnp.transpose(w, (1, 0, 2)).reshape(C, H * hs)

    wqkv = jnp.concatenate([flat(wq) * scale, flat(wk), flat(wv)], axis=-1)
    return (wqkv.astype(jnp.bfloat16),
            wp_t.astype(jnp.bfloat16),
            bp.astype(jnp.float32))


def reference_mha(x, wq, wk, wv, wp_t, bp):
    """Pure-JAX f32 reference reproducing the PyTorch forward exactly."""
    B, T, C = x.shape
    scale = C ** (-0.5)
    mask = jnp.tril(jnp.ones((T, T), dtype=bool))
    outs = []
    for h in range(wq.shape[0]):
        q = x @ wq[h]
        k = x @ wk[h]
        v = x @ wv[h]
        wei = (q @ jnp.swapaxes(k, -1, -2)) * scale
        wei = jnp.where(mask[None], wei, -jnp.inf)
        wei = jax.nn.softmax(wei, axis=-1)
        outs.append(wei @ v)
    cat = jnp.concatenate(outs, axis=-1)
    return cat @ wp_t + bp[0]


if __name__ == "__main__":
    B, T, C = 2, BLOCK_SIZE, N_EMBD
    H, hs = NUM_HEADS, HEAD_SIZE

    key = jax.random.PRNGKey(0)
    kx, kq, kk, kv, kp, kb = jax.random.split(key, 6)

    x = jax.random.normal(kx, (B, T, C), dtype=jnp.float32)
    # deterministic synthetic parameters (not a checkpoint load)
    wq = 0.02 * jax.random.normal(kq, (H, C, hs), dtype=jnp.float32)
    wk = 0.02 * jax.random.normal(kk, (H, C, hs), dtype=jnp.float32)
    wv = 0.02 * jax.random.normal(kv, (H, C, hs), dtype=jnp.float32)
    wp_t = 0.02 * jax.random.normal(kp, (C, C), dtype=jnp.float32)   # W_proj.T
    bp = 0.02 * jax.random.normal(kb, (1, C), dtype=jnp.float32)

    # one-time host-side prep: fused bf16 QKV slab (scale folded into Wq), bf16 proj
    wqkv_bf, wp_t_bf, bp_f32 = prepare_params(wq, wk, wv, wp_t, bp)

    out = multi_head_attention(x, wqkv_bf, wp_t_bf, bp_f32)
    out = jax.block_until_ready(out)

    ref = reference_mha(x, wq, wk, wv, wp_t, bp)
    assert out.shape == (B, T, C)
    # bf16 MXU operands + approx reciprocal -> relaxed tolerance
    assert jnp.allclose(out, ref, atol=1e-2, rtol=1e-2), "mismatch vs reference"

    print("KERNEL_OK")
</pallas_src>

<mosaic_0001>
module attributes {stable_mosaic.version = 11 : i64} {
  func.func @mha_kernel(%arg0: i32, %arg1: memref<64x128xf32, #tpu.memory_space<vmem>>, %arg2: memref<128x384xbf16, #tpu.memory_space<vmem>>, %arg3: memref<128x128xbf16, #tpu.memory_space<vmem>>, %arg4: memref<1x128xf32, #tpu.memory_space<vmem>>, %arg5: memref<64x128xf32, #tpu.memory_space<vmem>>, %arg6: memref<64x384xbf16, #tpu.memory_space<vmem>>, %arg7: memref<64x128xbf16, #tpu.memory_space<vmem>>) attributes {dimension_semantics = [#tpu.dimension_semantics<parallel>], iteration_bounds = array<i64: 2>, scalar_prefetch = 0 : i64, scratch_operands = 2 : i64, tpu.core_type = #tpu.core_type<tc>, window_params = [{transform_indices = @transform_0, window_bounds = array<i64: 64, 128>}, {pipeline_mode = #tpu.pipeline_mode<synchronous>, transform_indices = @transform_1, window_bounds = array<i64: 128, 384>}, {pipeline_mode = #tpu.pipeline_mode<synchronous>, transform_indices = @transform_2, window_bounds = array<i64: 128, 128>}, {pipeline_mode = #tpu.pipeline_mode<synchronous>, transform_indices = @transform_3, window_bounds = array<i64: 1, 128>}, {transform_indices = @transform_4, window_bounds = array<i64: 64, 128>}]} {
    %c0 = arith.constant 0 : index
    %c0_0 = arith.constant 0 : index
    %0 = vector.load %arg1[%c0, %c0_0] : memref<64x128xf32, #tpu.memory_space<vmem>>, vector<64x128xf32>
    %1 = arith.truncf %0 : vector<64x128xf32> to vector<64x128xbf16>
    %c0_1 = arith.constant 0 : index
    %c0_2 = arith.constant 0 : index
    %2 = vector.load %arg2[%c0_1, %c0_2] : memref<128x384xbf16, #tpu.memory_space<vmem>>, vector<128x384xbf16>
    %cst = arith.constant dense<0.000000e+00> : vector<64x384xf32>
    %3 = tpu.matmul %1, %2, %cst {dimension_numbers = #tpu.dot_dimension_numbers<[1], [0], [0], [1], [0, 0, 1, 1], [], []>} : vector<64x128xbf16>, vector<128x384xbf16>, vector<64x384xf32> -> vector<64x384xf32>
    %4 = arith.truncf %3 : vector<64x384xf32> to vector<64x384xbf16>
    %c0_3 = arith.constant 0 : index
    %c0_4 = arith.constant 0 : index
    %5 = vector.load %arg6[%c0_3, %c0_4] : memref<64x384xbf16, #tpu.memory_space<vmem>>, vector<64x384xbf16>
    tpu.vector_store %arg6[%c0_3, %c0_4], %4 {strides = array<i32>} : memref<64x384xbf16, #tpu.memory_space<vmem>>, vector<64x384xbf16>,
    %6 = tpu.iota {dimensions = array<i32: 0>} : vector<64x64xi32>
    %7 = tpu.iota {dimensions = array<i32: 1>} : vector<64x64xi32>
    %8 = arith.cmpi sle, %7, %6 : vector<64x64xi32>
    %c0_5 = arith.constant 0 : index
    %c0_6 = arith.constant 0 : index
    %9 = vector.load %arg6[%c0_5, %c0_6] : memref<64x384xbf16, #tpu.memory_space<vmem>>, vector<64x32xbf16>
    %c0_7 = arith.constant 0 : index
    %c128 = arith.constant 128 : index
    %10 = vector.load %arg6[%c0_7, %c128] : memref<64x384xbf16, #tpu.memory_space<vmem>>, vector<64x32xbf16>
    %c0_8 = arith.constant 0 : index
    %c256 = arith.constant 256 : index
    %11 = vector.load %arg6[%c0_8, %c256] : memref<64x384xbf16, #tpu.memory_space<vmem>>, vector<64x32xbf16>
    %cst_9 = arith.constant dense<0.000000e+00> : vector<64x64xf32>
    %12 = tpu.matmul %9, %10, %cst_9 {dimension_numbers = #tpu.dot_dimension_numbers<[1], [1], [0], [0], [0, 0, 1, 0], [], []>} : vector<64x32xbf16>, vector<64x32xbf16>, vector<64x64xf32> -> vector<64x64xf32>
    %cst_10 = arith.constant 0xFF800000 : f32
    %13 = vector.broadcast %cst_10 : f32 to vector<64x64xf32>
    %14 = arith.select %8, %12, %13 : vector<64x64xi1>, vector<64x64xf32>
    %cst_11 = arith.constant dense<0xFF800000> : vector<64xf32>
    %15 = vector.multi_reduction <maximumf>, %14, %cst_11 [1] : vector<64x64xf32> to vector<64xf32>
    %16 = vector.shape_cast %15 : vector<64xf32> to vector<64x1xf32>
    %17 = vector.broadcast %16 : vector<64x1xf32> to vector<64x64xf32>
    %18 = arith.subf %14, %17 : vector<64x64xf32>
    %19 = math.exp %18 : vector<64x64xf32>
    %cst_12 = arith.constant dense<0.000000e+00> : vector<64xf32>
    %20 = vector.multi_reduction <add>, %19, %cst_12 [1] : vector<64x64xf32> to vector<64xf32>
    %21 = vector.shape_cast %20 : vector<64xf32> to vector<64x1xf32>
    %22 = tpu.reciprocal %21 {approx = true} : vector<64x1xf32> -> vector<64x1xf32>
    %23 = vector.broadcast %22 : vector<64x1xf32> to vector<64x64xf32>
    %24 = arith.mulf %19, %23 : vector<64x64xf32>
    %25 = arith.truncf %24 : vector<64x64xf32> to vector<64x64xbf16>
    %cst_13 = arith.constant dense<0.000000e+00> : vector<64x32xf32>
    %26 = tpu.matmul %25, %11, %cst_13 {dimension_numbers = #tpu.dot_dimension_numbers<[1], [0], [0], [1], [0, 0, 1, 1], [], []>} : vector<64x64xbf16>, vector<64x32xbf16>, vector<64x32xf32> -> vector<64x32xf32>
    %27 = arith.truncf %26 : vector<64x32xf32> to vector<64x32xbf16>
    %c0_14 = arith.constant 0 : index
    %c0_15 = arith.constant 0 : index
    %28 = vector.load %arg7[%c0_14, %c0_15] : memref<64x128xbf16, #tpu.memory_space<vmem>>, vector<64x32xbf16>
    tpu.vector_store %arg7[%c0_14, %c0_15], %27 {strides = array<i32>} : memref<64x128xbf16, #tpu.memory_space<vmem>>, vector<64x32xbf16>,
    %c0_16 = arith.constant 0 : index
    %c32 = arith.constant 32 : index
    %29 = vector.load %arg6[%c0_16, %c32] : memref<64x384xbf16, #tpu.memory_space<vmem>>, vector<64x32xbf16>
    %c0_17 = arith.constant 0 : index
    %c160 = arith.constant 160 : index
    %30 = vector.load %arg6[%c0_17, %c160] : memref<64x384xbf16, #tpu.memory_space<vmem>>, vector<64x32xbf16>
    %c0_18 = arith.constant 0 : index
    %c288 = arith.constant 288 : index
    %31 = vector.load %arg6[%c0_18, %c288] : memref<64x384xbf16, #tpu.memory_space<vmem>>, vector<64x32xbf16>
    %cst_19 = arith.constant dense<0.000000e+00> : vector<64x64xf32>
    %32 = tpu.matmul %29, %30, %cst_19 {dimension_numbers = #tpu.dot_dimension_numbers<[1], [1], [0], [0], [0, 0, 1, 0], [], []>} : vector<64x32xbf16>, vector<64x32xbf16>, vector<64x64xf32> -> vector<64x64xf32>
    %cst_20 = arith.constant 0xFF800000 : f32
    %33 = vector.broadcast %cst_20 : f32 to vector<64x64xf32>
    %34 = arith.select %8, %32, %33 : vector<64x64xi1>, vector<64x64xf32>
    %cst_21 = arith.constant dense<0xFF800000> : vector<64xf32>
    %35 = vector.multi_reduction <maximumf>, %34, %cst_21 [1] : vector<64x64xf32> to vector<64xf32>
    %36 = vector.shape_cast %35 : vector<64xf32> to vector<64x1xf32>
    %37 = vector.broadcast %36 : vector<64x1xf32> to vector<64x64xf32>
    %38 = arith.subf %34, %37 : vector<64x64xf32>
    %39 = math.exp %38 : vector<64x64xf32>
    %cst_22 = arith.constant dense<0.000000e+00> : vector<64xf32>
    %40 = vector.multi_reduction <add>, %39, %cst_22 [1] : vector<64x64xf32> to vector<64xf32>
    %41 = vector.shape_cast %40 : vector<64xf32> to vector<64x1xf32>
    %42 = tpu.reciprocal %41 {approx = true} : vector<64x1xf32> -> vector<64x1xf32>
    %43 = vector.broadcast %42 : vector<64x1xf32> to vector<64x64xf32>
    %44 = arith.mulf %39, %43 : vector<64x64xf32>
    %45 = arith.truncf %44 : vector<64x64xf32> to vector<64x64xbf16>
    %cst_23 = arith.constant dense<0.000000e+00> : vector<64x32xf32>
    %46 = tpu.matmul %45, %31, %cst_23 {dimension_numbers = #tpu.dot_dimension_numbers<[1], [0], [0], [1], [0, 0, 1, 1], [], []>} : vector<64x64xbf16>, vector<64x32xbf16>, vector<64x32xf32> -> vector<64x32xf32>
    %47 = arith.truncf %46 : vector<64x32xf32> to vector<64x32xbf16>
    %c0_24 = arith.constant 0 : index
    %c32_25 = arith.constant 32 : index
    %48 = vector.load %arg7[%c0_24, %c32_25] : memref<64x128xbf16, #tpu.memory_space<vmem>>, vector<64x32xbf16>
    tpu.vector_store %arg7[%c0_24, %c32_25], %47 {strides = array<i32>} : memref<64x128xbf16, #tpu.memory_space<vmem>>, vector<64x32xbf16>,
    %c0_26 = arith.constant 0 : index
    %c64 = arith.constant 64 : index
    %49 = vector.load %arg6[%c0_26, %c64] : memref<64x384xbf16, #tpu.memory_space<vmem>>, vector<64x32xbf16>
    %c0_27 = arith.constant 0 : index
    %c192 = arith.constant 192 : index
    %50 = vector.load %arg6[%c0_27, %c192] : memref<64x384xbf16, #tpu.memory_space<vmem>>, vector<64x32xbf16>
    %c0_28 = arith.constant 0 : index
    %c320 = arith.constant 320 : index
    %51 = vector.load %arg6[%c0_28, %c320] : memref<64x384xbf16, #tpu.memory_space<vmem>>, vector<64x32xbf16>
    %cst_29 = arith.constant dense<0.000000e+00> : vector<64x64xf32>
    %52 = tpu.matmul %49, %50, %cst_29 {dimension_numbers = #tpu.dot_dimension_numbers<[1], [1], [0], [0], [0, 0, 1, 0], [], []>} : vector<64x32xbf16>, vector<64x32xbf16>, vector<64x64xf32> -> vector<64x64xf32>
    %cst_30 = arith.constant 0xFF800000 : f32
    %53 = vector.broadcast %cst_30 : f32 to vector<64x64xf32>
    %54 = arith.select %8, %52, %53 : vector<64x64xi1>, vector<64x64xf32>
    %cst_31 = arith.constant dense<0xFF800000> : vector<64xf32>
    %55 = vector.multi_reduction <maximumf>, %54, %cst_31 [1] : vector<64x64xf32> to vector<64xf32>
    %56 = vector.shape_cast %55 : vector<64xf32> to vector<64x1xf32>
    %57 = vector.broadcast %56 : vector<64x1xf32> to vector<64x64xf32>
    %58 = arith.subf %54, %57 : vector<64x64xf32>
    %59 = math.exp %58 : vector<64x64xf32>
    %cst_32 = arith.constant dense<0.000000e+00> : vector<64xf32>
    %60 = vector.multi_reduction <add>, %59, %cst_32 [1] : vector<64x64xf32> to vector<64xf32>
    %61 = vector.shape_cast %60 : vector<64xf32> to vector<64x1xf32>
    %62 = tpu.reciprocal %61 {approx = true} : vector<64x1xf32> -> vector<64x1xf32>
    %63 = vector.broadcast %62 : vector<64x1xf32> to vector<64x64xf32>
    %64 = arith.mulf %59, %63 : vector<64x64xf32>
    %65 = arith.truncf %64 : vector<64x64xf32> to vector<64x64xbf16>
    %cst_33 = arith.constant dense<0.000000e+00> : vector<64x32xf32>
    %66 = tpu.matmul %65, %51, %cst_33 {dimension_numbers = #tpu.dot_dimension_numbers<[1], [0], [0], [1], [0, 0, 1, 1], [], []>} : vector<64x64xbf16>, vector<64x32xbf16>, vector<64x32xf32> -> vector<64x32xf32>
    %67 = arith.truncf %66 : vector<64x32xf32> to vector<64x32xbf16>
    %c0_34 = arith.constant 0 : index
    %c64_35 = arith.constant 64 : index
    %68 = vector.load %arg7[%c0_34, %c64_35] : memref<64x128xbf16, #tpu.memory_space<vmem>>, vector<64x32xbf16>
    tpu.vector_store %arg7[%c0_34, %c64_35], %67 {strides = array<i32>} : memref<64x128xbf16, #tpu.memory_space<vmem>>, vector<64x32xbf16>,
    %c0_36 = arith.constant 0 : index
    %c96 = arith.constant 96 : index
    %69 = vector.load %arg6[%c0_36, %c96] : memref<64x384xbf16, #tpu.memory_space<vmem>>, vector<64x32xbf16>
    %c0_37 = arith.constant 0 : index
    %c224 = arith.constant 224 : index
    %70 = vector.load %arg6[%c0_37, %c224] : memref<64x384xbf16, #tpu.memory_space<vmem>>, vector<64x32xbf16>
    %c0_38 = arith.constant 0 : index
    %c352 = arith.constant 352 : index
    %71 = vector.load %arg6[%c0_38, %c352] : memref<64x384xbf16, #tpu.memory_space<vmem>>, vector<64x32xbf16>
    %cst_39 = arith.constant dense<0.000000e+00> : vector<64x64xf32>
    %72 = tpu.matmul %69, %70, %cst_39 {dimension_numbers = #tpu.dot_dimension_numbers<[1], [1], [0], [0], [0, 0, 1, 0], [], []>} : vector<64x32xbf16>, vector<64x32xbf16>, vector<64x64xf32> -> vector<64x64xf32>
    %cst_40 = arith.constant 0xFF800000 : f32
    %73 = vector.broadcast %cst_40 : f32 to vector<64x64xf32>
    %74 = arith.select %8, %72, %73 : vector<64x64xi1>, vector<64x64xf32>
    %cst_41 = arith.constant dense<0xFF800000> : vector<64xf32>
    %75 = vector.multi_reduction <maximumf>, %74, %cst_41 [1] : vector<64x64xf32> to vector<64xf32>
    %76 = vector.shape_cast %75 : vector<64xf32> to vector<64x1xf32>
    %77 = vector.broadcast %76 : vector<64x1xf32> to vector<64x64xf32>
    %78 = arith.subf %74, %77 : vector<64x64xf32>
    %79 = math.exp %78 : vector<64x64xf32>
    %cst_42 = arith.constant dense<0.000000e+00> : vector<64xf32>
    %80 = vector.multi_reduction <add>, %79, %cst_42 [1] : vector<64x64xf32> to vector<64xf32>
    %81 = vector.shape_cast %80 : vector<64xf32> to vector<64x1xf32>
    %82 = tpu.reciprocal %81 {approx = true} : vector<64x1xf32> -> vector<64x1xf32>
    %83 = vector.broadcast %82 : vector<64x1xf32> to vector<64x64xf32>
    %84 = arith.mulf %79, %83 : vector<64x64xf32>
    %85 = arith.truncf %84 : vector<64x64xf32> to vector<64x64xbf16>
    %cst_43 = arith.constant dense<0.000000e+00> : vector<64x32xf32>
    %86 = tpu.matmul %85, %71, %cst_43 {dimension_numbers = #tpu.dot_dimension_numbers<[1], [0], [0], [1], [0, 0, 1, 1], [], []>} : vector<64x64xbf16>, vector<64x32xbf16>, vector<64x32xf32> -> vector<64x32xf32>
    %87 = arith.truncf %86 : vector<64x32xf32> to vector<64x32xbf16>
    %c0_44 = arith.constant 0 : index
    %c96_45 = arith.constant 96 : index
    %88 = vector.load %arg7[%c0_44, %c96_45] : memref<64x128xbf16, #tpu.memory_space<vmem>>, vector<64x32xbf16>
    tpu.vector_store %arg7[%c0_44, %c96_45], %87 {strides = array<i32>} : memref<64x128xbf16, #tpu.memory_space<vmem>>, vector<64x32xbf16>,
    %c0_46 = arith.constant 0 : index
    %c0_47 = arith.constant 0 : index
    %89 = vector.load %arg7[%c0_46, %c0_47] : memref<64x128xbf16, #tpu.memory_space<vmem>>, vector<64x128xbf16>
    %c0_48 = arith.constant 0 : index
    %c0_49 = arith.constant 0 : index
    %90 = vector.load %arg3[%c0_48, %c0_49] : memref<128x128xbf16, #tpu.memory_space<vmem>>, vector<128x128xbf16>
    %cst_50 = arith.constant dense<0.000000e+00> : vector<64x128xf32>
    %91 = tpu.matmul %89, %90, %cst_50 {dimension_numbers = #tpu.dot_dimension_numbers<[1], [0], [0], [1], [0, 0, 1, 1], [], []>} : vector<64x128xbf16>, vector<128x128xbf16>, vector<64x128xf32> -> vector<64x128xf32>
    %c0_51 = arith.constant 0 : index
    %c0_52 = arith.constant 0 : index
    %92 = vector.load %arg4[%c0_51, %c0_52] : memref<1x128xf32, #tpu.memory_space<vmem>>, vector<1x128xf32>
    %93 = vector.broadcast %92 : vector<1x128xf32> to vector<64x128xf32>
    %94 = arith.addf %91, %93 : vector<64x128xf32>
    %c0_53 = arith.constant 0 : index
    %c0_54 = arith.constant 0 : index
    %95 = vector.load %arg5[%c0_53, %c0_54] : memref<64x128xf32, #tpu.memory_space<vmem>>, vector<64x128xf32>
    tpu.vector_store %arg5[%c0_53, %c0_54], %94 {strides = array<i32>} : memref<64x128xf32, #tpu.memory_space<vmem>>, vector<64x128xf32>,
    return
  }
  func.func @transform_0(%arg0: i32) -> (i32, i32) {
    %c0_i32 = arith.constant 0 : i32
    %c0_i32_0 = arith.constant 0 : i32
    return %arg0, %c0_i32 : i32, i32
  }
  func.func @transform_1(%arg0: i32) -> (i32, i32) {
    %c0_i32 = arith.constant 0 : i32
    %c0_i32_0 = arith.constant 0 : i32
    %c0_i32_1 = arith.constant 0 : i32
    return %c0_i32, %c0_i32_0 : i32, i32
  }
  func.func @transform_2(%arg0: i32) -> (i32, i32) {
    %c0_i32 = arith.constant 0 : i32
    %c0_i32_0 = arith.constant 0 : i32
    %c0_i32_1 = arith.constant 0 : i32
    return %c0_i32, %c0_i32_0 : i32, i32
  }
  func.func @transform_3(%arg0: i32) -> (i32, i32) {
    %c0_i32 = arith.constant 0 : i32
    %c0_i32_0 = arith.constant 0 : i32
    %c0_i32_1 = arith.constant 0 : i32
    return %c0_i32, %c0_i32_0 : i32, i32
  }
  func.func @transform_4(%arg0: i32) -> (i32, i32) {
    %c0_i32 = arith.constant 0 : i32
    %c0_i32_0 = arith.constant 0 : i32
    return %arg0, %c0_i32 : i32, i32
  }
}

</mosaic_0001>

<llo_original>
// kernel: tpu_custom_call.1
$region0: #{tpu_custom_call.1}
  #allocation0 [shape = 'u32[]', space=smem, size = 0x4, offset = 0x4, fixed_abs, tag = 'smem constant byte address 0x4 - core index']
  #allocation1 [shape = 'u32[144,128]{1,0:T(1,128)}', space=vmem, size = 0x12000, scoped, tag = 'internal scratch']
  #allocation2 [shape = 'bf16[64,384]{1,0:T(16,128)(2,1)}', space=vmem, size = 0xc000, scoped, tag = 'scratch operand']
  #allocation3 [shape = 'bf16[64,128]{1,0:T(16,128)(2,1)}', space=vmem, size = 0x4000, scoped, tag = 'scratch operand']
  %s0 = inlined_call_operand.hbm [shape: f32[128,128], index: 0, kind: input, shape index: {}]
  %s1 = inlined_call_operand.hbm [shape: bf16[128,384], index: 1, kind: input, shape index: {}]
  %s2 = inlined_call_operand.hbm [shape: bf16[128,128], index: 2, kind: input, shape index: {}]
  %s3 = inlined_call_operand.vmem [shape: f32[1,128], index: 3, kind: input, shape index: {}]
  %s4 = inlined_call_operand.hbm [shape: f32[128,128], index: 4, kind: output, shape index: {}]
  %s5 = sld [smem:[#allocation0]]
  $region61: #{tpu_custom_call.1} parent=0
    _
  %s7 = ssub.s32 1, %s5
  %s8 = scalar_select 0, %s7, %s5
  $region1: #{tpu_custom_call.1} parent=0
    #allocation4 [shape = 'u8[65536]{0}', space=vmem, size = 0x10000, scoped, tag = 'input window, operand 0']
    #allocation5 [shape = 's32[2]{0}', space=sflag, size = 0x8, scoped, tag = 'scoped memory for tpu_custom_call.1']
    #allocation6 [shape = 's32[2]{0}', space=sflag, size = 0x8, scoped, tag = 'scoped memory for tpu_custom_call.1']
    #allocation7 [shape = 'u8[98304]{0}', space=vmem, size = 0x18000, scoped, tag = 'input window, operand 1, single buffered']
    #allocation8 [shape = 's32[1]{0}', space=sflag, size = 0x4, scoped, tag = 'scoped memory for tpu_custom_call.1']
    #allocation9 [shape = 'u8[32768]{0}', space=vmem, size = 0x8000, scoped, tag = 'input window, operand 2, single buffered']
    #allocation10 [shape = 'u8[65536]{0}', space=vmem, size = 0x10000, scoped, tag = 'output window, operand 0']
    %9 = vsyncpa [#allocation5], 0
    %s10 = scalar_lea.sflag [#allocation5], 1
    %11 = vsyncpa %s10, 0
    %12 = vsyncpa [#allocation8], 0
    %13 = vsyncpa [#allocation6], 0
    %s14 = scalar_lea.sflag [#allocation6], 1
    %15 = vsyncpa %s14, 0
    loop: start=0, step=1, limit=4
    $region2: #{tpu_custom_call.1} parent=1 // loop_pre_header
      _
    $region3: #{tpu_custom_call.1} parent=1 // loop_header
      %s17 = sphi 0, %s21
      %p18 = scmp.ge.s32.totalorder %s17, 4
      %s27 = sphi 0, %s29
      %s30 = sphi 0, %s27
      %s31 = sphi 0, %s30
      %s47 = sphi 0, %s31
      %s51 = sphi 0, %s51
      %s53 = sphi 0, %s51
      %s54 = sphi 0, %s53
      %s68 = sphi 0, %s54
      %s72 = sphi 0, %s72
      %s74 = sphi 0, %s72
      %s75 = sphi 0, %s74
      %s89 = sphi 0, %s75
      %s93 = sphi 0, %s93
      %s95 = sphi 0, %s93
      %s96 = sphi 0, %s95
      %s110 = sphi 0, %s96
      %s116 = sphi 0, %s118
      %s119 = sphi 0, %s116
      %s120 = sphi 0, %s119
      %s136 = sphi 0, %s120
    $region4: #{tpu_custom_call.1} parent=1 // loop_header_branch
      %20 = sbr.rel (%p18) target = $region8
    $region5: #{tpu_custom_call.1} parent=1 // loop_body
      %s22 = ssub.s32 %s17, 1
      %s23 = ssub.s32 %s17, 2
      %s24 = sadd.s32 %s17, 1
      %s25 = ssub.s32 %s17, %s24
      %p26 = scmp.eq.s32.totalorder %s25, 0
      %s28 = sadd.s32 %s27, 1
      %s29 = scalar_select %p26, %s27, %s28
      %p32 = pneg %p26
      %p33 = scmp.eq.s32.totalorder %s17, 1
      %p34 = por %p32, %p33
      %p35 = scmp.ne.s32.totalorder %s27, %s30
      %p36 = scmp.eq.s32.totalorder %s17, 0
      %p37 = por %p35, %p36
      %p38 = scmp.ne.s32.totalorder %s27, %s30
      %p39 = scmp.eq.s32.totalorder %s22, 1
      %p40 = por %p38, %p39
      %p41 = scmp.ne.s32.totalorder %s30, %s31
      %p42 = scmp.eq.s32.totalorder %s22, 0
      %p43 = por %p41, %p42
      %p44 = scmp.ne.s32.totalorder %s30, %s31
      %p45 = scmp.eq.s32.totalorder %s23, 1
      %p46 = por %p44, %p45
      %p48 = scmp.ne.s32.totalorder %s31, %s47
      %p49 = scmp.eq.s32.totalorder %s23, 0
      %p50 = por %p48, %p49
      %s52 = sadd.s32 %s51, 1
      %p55 = scmp.eq.s32.totalorder %s17, 1
      %p56 = scmp.ne.s32.totalorder %s51, %s53
      %p57 = scmp.eq.s32.totalorder %s17, 0
      %p58 = por %p56, %p57
      %p59 = scmp.ne.s32.totalorder %s51, %s53
      %p60 = scmp.eq.s32.totalorder %s22, 1
      %p61 = por %p59, %p60
      %p62 = scmp.ne.s32.totalorder %s53, %s54
      %p63 = scmp.eq.s32.totalorder %s22, 0
      %p64 = por %p62, %p63
      %p65 = scmp.ne.s32.totalorder %s53, %s54
      %p66 = scmp.eq.s32.totalorder %s23, 1
      %p67 = por %p65, %p66
      %p69 = scmp.ne.s32.totalorder %s54, %s68
      %p70 = scmp.eq.s32.totalorder %s23, 0
      %p71 = por %p69, %p70
      %s73 = sadd.s32 %s72, 1
      %p76 = scmp.eq.s32.totalorder %s17, 1
      %p77 = scmp.ne.s32.totalorder %s72, %s74
      %p78 = scmp.eq.s32.totalorder %s17, 0
      %p79 = por %p77, %p78
      %p80 = scmp.ne.s32.totalorder %s72, %s74
      %p81 = scmp.eq.s32.totalorder %s22, 1
      %p82 = por %p80, %p81
      %p83 = scmp.ne.s32.totalorder %s74, %s75
      %p84 = scmp.eq.s32.totalorder %s22, 0
      %p85 = por %p83, %p84
      %p86 = scmp.ne.s32.totalorder %s74, %s75
      %p87 = scmp.eq.s32.totalorder %s23, 1
      %p88 = por %p86, %p87
      %p90 = scmp.ne.s32.totalorder %s75, %s89
      %p91 = scmp.eq.s32.totalorder %s23, 0
      %p92 = por %p90, %p91
      %s94 = sadd.s32 %s93, 1
      %p97 = scmp.eq.s32.totalorder %s17, 1
      %p98 = scmp.ne.s32.totalorder %s93, %s95
      %p99 = scmp.eq.s32.totalorder %s17, 0
      %p100 = por %p98, %p99
      %p101 = scmp.ne.s32.totalorder %s93, %s95
      %p102 = scmp.eq.s32.totalorder %s22, 1
      %p103 = por %p101, %p102
      %p104 = scmp.ne.s32.totalorder %s95, %s96
      %p105 = scmp.eq.s32.totalorder %s22, 0
      %p106 = por %p104, %p105
      %p107 = scmp.ne.s32.totalorder %s95, %s96
      %p108 = scmp.eq.s32.totalorder %s23, 1
      %p109 = por %p107, %p108
      %p111 = scmp.ne.s32.totalorder %s96, %s110
      %p112 = scmp.eq.s32.totalorder %s23, 0
      %p113 = por %p111, %p112
      %s114 = ssub.s32 %s17, %s24
      %p115 = scmp.eq.s32.totalorder %s114, 0
      %s117 = sadd.s32 %s116, 1
      %s118 = scalar_select %p115, %s116, %s117
      %p121 = pneg %p115
      %p122 = scmp.eq.s32.totalorder %s17, 1
      %p123 = por %p121, %p122
      %p124 = scmp.ne.s32.totalorder %s116, %s119
      %p125 = scmp.eq.s32.totalorder %s17, 0
      %p126 = por %p124, %p125
      %p127 = scmp.ne.s32.totalorder %s116, %s119
      %p128 = scmp.eq.s32.totalorder %s22, 1
      %p129 = por %p127, %p128
      %p130 = scmp.ne.s32.totalorder %s119, %s120
      %p131 = scmp.eq.s32.totalorder %s22, 0
      %p132 = por %p130, %p131
      %p133 = scmp.ne.s32.totalorder %s119, %s120
      %p134 = scmp.eq.s32.totalorder %s23, 1
      %p135 = por %p133, %p134
      %p137 = scmp.ne.s32.totalorder %s120, %s136
      %p138 = scmp.eq.s32.totalorder %s23, 0
      %p139 = por %p137, %p138
      %p140 = scmp.le.s32.totalorder 1, %s17
      %p141 = scmp.lt.s32.totalorder %s17, 3
      %p142 = pnand %p140, %p141
      %p143 = pneg %p142
      // Predicated region
      $region9: #{tpu_custom_call.1} parent=5 // pred_check
        _
      $region10: #{tpu_custom_call.1} parent=5 // pred_check_branch
        %145 = sbr.rel (%p142) target = $region12
      $region11: #{tpu_custom_call.1} parent=5 // pred_region
        %s146 = ssub.s32 %s17, 1
        // Predicated region
        $region13: #{tpu_custom_call.1} parent=11 // pred_check
          %p147 = pneg %p64
        $region14: #{tpu_custom_call.1} parent=11 // pred_check_branch
          %149 = sbr.rel (%p147) target = $region16
        $region15: #{tpu_custom_call.1} parent=11 // pred_region
          %s151 = ssub.s32 3072, 3072
          %152 = vsyncadd [#allocation8], %s151
          %s153 = sshll.u32 [#allocation7], 4
          %s154 = int_to_ptr.vmem [resolvable:$true] %s153
          %159 = dma.hbm_to_vmem [thread:$0]  %s1, 3072, %s154, [#allocation8], 192, 192, 12
        $region16: #{tpu_custom_call.1} parent=11 // pred_fallthru
          _
        // Predicated region
        $region17: #{tpu_custom_call.1} parent=11 // pred_check
          %p160 = pneg %p85
        $region18: #{tpu_custom_call.1} parent=11 // pred_check_branch
          %162 = sbr.rel (%p160) target = $region20
        $region19: #{tpu_custom_call.1} parent=11 // pred_region
          %s164 = ssub.s32 1024, 1024
          %165 = vsyncadd [#allocation8], %s164
          %s166 = sshll.u32 [#allocation9], 4
          %s167 = int_to_ptr.vmem [resolvable:$true] %s166
          %172 = dma.hbm_to_vmem [thread:$0]  %s2, 1024, %s167, [#allocation8], 64, 64, 4
        $region20: #{tpu_custom_call.1} parent=11 // pred_fallthru
          _
        // Predicated region
        $region21: #{tpu_custom_call.1} parent=11 // pred_check
          %p173 = pneg %p106
        $region22: #{tpu_custom_call.1} parent=11 // pred_check_branch
          %175 = sbr.rel (%p173) target = $region24
        $region23: #{tpu_custom_call.1} parent=11 // pred_region
          _
        $region24: #{tpu_custom_call.1} parent=11 // pred_fallthru
          _
      $region12: #{tpu_custom_call.1} parent=5 // pred_fallthru
        _
      %p176 = scmp.lt.s32.totalorder %s17, 2
      // Predicated region
      $region25: #{tpu_custom_call.1} parent=5 // pred_check
        %p177 = pneg %p176
      $region26: #{tpu_custom_call.1} parent=5 // pred_check_branch
        %179 = sbr.rel (%p177) target = $region28
      $region27: #{tpu_custom_call.1} parent=5 // pred_region
        // Predicated region
        $region29: #{tpu_custom_call.1} parent=27 // pred_check
          %p180 = pneg %p37
        $region30: #{tpu_custom_call.1} parent=27 // pred_check_branch
          %182 = sbr.rel (%p180) target = $region32
        $region31: #{tpu_custom_call.1} parent=27 // pred_region
          %s183 = sand.u32 %s27, 1
          %s184 = scalar_lea.sflag [#allocation5], %s183
          %s185 = sand.u32 %s27, 1
          %s186 = smul.addr %s185, 64
          %s187 = scalar_lea.vmem [#allocation4], %s186
          %s188 = smul.u32 8, %s17
          %s190 = ssub.s32 1024, 1024
          %191 = vsyncadd %s184, %s190
          %s192 = smul.addr %s188, 128
          %s193 = scalar_lea.hbm %s0, %s192
          %s194 = sshll.u32 %s187, 4
          %s195 = int_to_ptr.vmem [resolvable:$true] %s194
          %200 = dma.hbm_to_vmem [thread:$0]  %s193, 1024, %s195, %s184, 128, 128, 8
        $region32: #{tpu_custom_call.1} parent=27 // pred_fallthru
          _
      $region28: #{tpu_custom_call.1} parent=5 // pred_fallthru
        _
      %p201 = scmp.le.s32.totalorder 1, %s17
      %p202 = scmp.lt.s32.totalorder %s17, 3
      %p203 = pnand %p201, %p202
      %p204 = pneg %p203
      // Predicated region
      $region33: #{tpu_custom_call.1} parent=5 // pred_check
        _
      $region34: #{tpu_custom_call.1} parent=5 // pred_check_branch
        %206 = sbr.rel (%p203) target = $region36
      $region35: #{tpu_custom_call.1} parent=5 // pred_region
        %s207 = ssub.s32 %s17, 1
        %s208 = sand.u32 %s30, 1
        %s209 = scalar_lea.sflag [#allocation5], %s208
        %s210 = sand.u32 %s30, 1
        %s211 = smul.addr %s210, 64
        %s212 = scalar_lea.vmem [#allocation4], %s211
        // Predicated region
        $region37: #{tpu_custom_call.1} parent=35 // pred_check
          %p213 = pneg %p43
        $region38: #{tpu_custom_call.1} parent=35 // pred_check_branch
          %215 = sbr.rel (%p213) target = $region40
        $region39: #{tpu_custom_call.1} parent=35 // pred_region
          %216 = dma.done %s209, 1024
        $region40: #{tpu_custom_call.1} parent=35 // pred_fallthru
          _
        // Predicated region
        $region41: #{tpu_custom_call.1} parent=35 // pred_check
          %p217 = pneg %p64
        $region42: #{tpu_custom_call.1} parent=35 // pred_check_branch
          %219 = sbr.rel (%p217) target = $region44
        $region43: #{tpu_custom_call.1} parent=35 // pred_region
          %220 = dma.done [#allocation8], 3072
        $region44: #{tpu_custom_call.1} parent=35 // pred_fallthru
          _
        // Predicated region
        $region45: #{tpu_custom_call.1} parent=35 // pred_check
          %p221 = pneg %p85
        $region46: #{tpu_custom_call.1} parent=35 // pred_check_branch
          %223 = sbr.rel (%p221) target = $region48
        $region47: #{tpu_custom_call.1} parent=35 // pred_region
          %224 = dma.done [#allocation8], 1024
        $region48: #{tpu_custom_call.1} parent=35 // pred_fallthru
          _
        %s225 = sand.u32 %s30, 1
        %s226 = scalar_lea.sflag [#allocation5], %s225
        %s227 = sand.u32 %s30, 1
        %s228 = smul.addr %s227, 64
        %s229 = scalar_lea.vmem [#allocation4], %s228
        %p230 = pneg %p43
        %p231 = pneg %p40
        %p232 = pneg %p64
        %p233 = pneg %p61
        %p234 = pneg %p85
        %p235 = pneg %p82
        %p236 = pneg %p106
        %p237 = pneg %p103
        %p238 = pneg %p132
        %p239 = pneg %p129
        %s240 = sand.u32 %s119, 1
        %s241 = scalar_lea.sflag [#allocation6], %s240
        %s242 = sand.u32 %s119, 1
        %s243 = smul.addr %s242, 64
        %s244 = scalar_lea.vmem [#allocation10], %s243
        %s245 = smul.u32 8, %s22
        %s246 = smul.u32 8, %s22
        %v248 = vld [vmem:[%s212] sm:$0xff]
        %v249 = vld [vmem:[%s212 + $0x8] sm:$0xff]
        %v250 = vld [vmem:[%s212 + $0x10] sm:$0xff]
        %v251 = vld [vmem:[%s212 + $0x18] sm:$0xff]
        %v252 = vld [vmem:[%s212 + $0x20] sm:$0xff]
        %v253 = vld [vmem:[%s212 + $0x28] sm:$0xff]
        %v254 = vld [vmem:[%s212 + $0x30] sm:$0xff]
        %v255 = vld [vmem:[%s212 + $0x38] sm:$0xff]
        %v256 = vpack.c.bf16 %v249, %v248
        %v257 = vpack.c.bf16 %v251, %v250
        %v258 = vpack.c.bf16 %v253, %v252
        %v259 = vpack.c.bf16 %v255, %v254
        %v260 = vld [vmem:[#allocation7] sm:$0xff]
        %v261 = vld [vmem:[#allocation7 + $0x8] sm:$0xf]
        %v262 = vld [vmem:[#allocation7 + $0xc] sm:$0xff]
        %v263 = vld [vmem:[#allocation7 + $0x14] sm:$0xf]
        %v264 = vld [vmem:[#allocation7 + $0x18] sm:$0xff]
        %v265 = vld [vmem:[#allocation7 + $0x20] sm:$0xf]
        %v266 = vld [vmem:[#allocation7 + $0x24] sm:$0xff]
        %v267 = vld [vmem:[#allocation7 + $0x2c] sm:$0xf]
        %v268 = vld [vmem:[#allocation7 + $0x30] sm:$0xff]
        %v269 = vld [vmem:[#allocation7 + $0x38] sm:$0xf]
        %v270 = vld [vmem:[#allocation7 + $0x3c] sm:$0xff]
        %v271 = vld [vmem:[#allocation7 + $0x44] sm:$0xf]
        %v272 = vld [vmem:[#allocation7 + $0x48] sm:$0xff]
        %v273 = vld [vmem:[#allocation7 + $0x50] sm:$0xf]
        %v274 = vld [vmem:[#allocation7 + $0x54] sm:$0xff]
        %v275 = vld [vmem:[#allocation7 + $0x5c] sm:$0xf]
        %v276 = vld [vmem:[#allocation7 + $0x60] sm:$0xff]
        %v277 = vld [vmem:[#allocation7 + $0x68] sm:$0xf]
        %v278 = vld [vmem:[#allocation7 + $0x6c] sm:$0xff]
        %v279 = vld [vmem:[#allocation7 + $0x74] sm:$0xf]
        %v280 = vld [vmem:[#allocation7 + $0x78] sm:$0xff]
        %v281 = vld [vmem:[#allocation7 + $0x80] sm:$0xf]
        %v282 = vld [vmem:[#allocation7 + $0x84] sm:$0xff]
        %v283 = vld [vmem:[#allocation7 + $0x8c] sm:$0xf]
        %v284 = vld [vmem:[#allocation7 + $0x90] sm:$0xff]
        %v285 = vld [vmem:[#allocation7 + $0x98] sm:$0xf]
        %v286 = vld [vmem:[#allocation7 + $0x9c] sm:$0xff]
        %v287 = vld [vmem:[#allocation7 + $0xa4] sm:$0xf]
        %v288 = vld [vmem:[#allocation7 + $0xa8] sm:$0xff]
        %v289 = vld [vmem:[#allocation7 + $0xb0] sm:$0xf]
        %v290 = vld [vmem:[#allocation7 + $0xb4] sm:$0xff]
        %v291 = vld [vmem:[#allocation7 + $0xbc] sm:$0xf]
        %v324 = vunpack.c.l.b16 %v260
        %v325 = vunpack.c.h.b16 %v260
        %v326 = vunpack.c.l.b16 %v261
        %v327 = vunpack.c.l.b16 %v262
        %v328 = vunpack.c.h.b16 %v262
        %v329 = vunpack.c.l.b16 %v263
        %v330 = vunpack.c.l.b16 %v264
        %v331 = vunpack.c.h.b16 %v264
        %v332 = vunpack.c.l.b16 %v265
        %v333 = vunpack.c.l.b16 %v266
        %v334 = vunpack.c.h.b16 %v266
        %v335 = vunpack.c.l.b16 %v267
        %v336 = vunpack.c.l.b16 %v268
        %v337 = vunpack.c.h.b16 %v268
        %v338 = vunpack.c.l.b16 %v269
        %v339 = vunpack.c.l.b16 %v270
        %v340 = vunpack.c.h.b16 %v270
        %v341 = vunpack.c.l.b16 %v271
        %v342 = vunpack.c.l.b16 %v272
        %v343 = vunpack.c.h.b16 %v272
        %v344 = vunpack.c.l.b16 %v273
        %v345 = vunpack.c.l.b16 %v274
        %v346 = vunpack.c.h.b16 %v274
        %v347 = vunpack.c.l.b16 %v275
        %v348 = vunpack.c.l.b16 %v276
        %v349 = vunpack.c.h.b16 %v276
        %v350 = vunpack.c.l.b16 %v277
        %v351 = vunpack.c.l.b16 %v278
        %v352 = vunpack.c.h.b16 %v278
        %v353 = vunpack.c.l.b16 %v279
        %v354 = vunpack.c.l.b16 %v280
        %v355 = vunpack.c.h.b16 %v280
        %v356 = vunpack.c.l.b16 %v281
        %v357 = vunpack.c.l.b16 %v282
        %v358 = vunpack.c.h.b16 %v282
        %v359 = vunpack.c.l.b16 %v283
        %v360 = vunpack.c.l.b16 %v284
        %v361 = vunpack.c.h.b16 %v284
        %v362 = vunpack.c.l.b16 %v285
        %v363 = vunpack.c.l.b16 %v286
        %v364 = vunpack.c.h.b16 %v286
        %v365 = vunpack.c.l.b16 %v287
        %v366 = vunpack.c.l.b16 %v288
        %v367 = vunpack.c.h.b16 %v288
        %v368 = vunpack.c.l.b16 %v289
        %v369 = vunpack.c.l.b16 %v290
        %v370 = vunpack.c.h.b16 %v290
        %v371 = vunpack.c.l.b16 %v291
        %v372 = vpack.c.b16 %v327, %v324
        %v373 = vpack.c.b16 %v328, %v325
        %v374 = vpack.c.b16 %v329, %v326
        %v375 = vpack.c.b16 %v333, %v330
        %v376 = vpack.c.b16 %v334, %v331
        %v377 = vpack.c.b16 %v335, %v332
        %v378 = vpack.c.b16 %v339, %v336
        %v379 = vpack.c.b16 %v340, %v337
        %v380 = vpack.c.b16 %v341, %v338
        %v381 = vpack.c.b16 %v345, %v342
        %v382 = vpack.c.b16 %v346, %v343
        %v383 = vpack.c.b16 %v347, %v344
        %v384 = vpack.c.b16 %v351, %v348
        %v385 = vpack.c.b16 %v352, %v349
        %v386 = vpack.c.b16 %v353, %v350
        %v387 = vpack.c.b16 %v357, %v354
        %v388 = vpack.c.b16 %v358, %v355
        %v389 = vpack.c.b16 %v359, %v356
        %v390 = vpack.c.b16 %v363, %v360
        %v391 = vpack.c.b16 %v364, %v361
        %v392 = vpack.c.b16 %v365, %v362
        %v393 = vpack.c.b16 %v369, %v366
        %v394 = vpack.c.b16 %v370, %v367
        %v395 = vpack.c.b16 %v371, %v368
        %420 = vmatprep.subr.bf16.mxu0 %v373
        %421 = vmatpush1.bf16.msra.mxu0 %v372
        %422 = vmatprep.subr.bf16.mxu0 %v376
        %423 = vmatpush1.bf16.msra.mxu0 %v375
        %424 = vmatprep.subr.bf16.mxu0 %v379
        %425 = vmatpush1.bf16.msra.mxu0 %v378
        %426 = vmatprep.subr.bf16.mxu0 %v382
        %427 = vmatpush1.bf16.msra.mxu0 %v381
        %428 = vmatprep.subr.bf16.mxu0 %v385
        %429 = vmatpush1.bf16.msra.mxu0 %v384
        %430 = vmatprep.subr.bf16.mxu0 %v388
        %431 = vmatpush1.bf16.msra.mxu0 %v387
        %432 = vmatprep.subr.bf16.mxu0 %v391
        %433 = vmatpush1.bf16.msra.mxu0 %v390
        %434 = vmatprep.subr.bf16.mxu0 %v394
        %435 = vmatpush1.bf16.msra.mxu0 %v393
        %436 = vmatprep.subr.bf16.mxu0 0
        %437 = vmatpush1.bf16.msra.mxu0 0
        %438 = vmatprep.subr.bf16.mxu0 0
        %439 = vmatpush1.bf16.msra.mxu0 0
        %440 = vmatprep.subr.bf16.mxu0 0
        %441 = vmatpush1.bf16.msra.mxu0 0
        %442 = vmatprep.subr.bf16.mxu0 0
        %443 = vmatpush1.bf16.msra.mxu0 0
        %444 = vmatprep.subr.bf16.mxu0 0
        %445 = vmatpush1.bf16.msra.mxu0 0
        %446 = vmatprep.subr.bf16.mxu0 0
        %447 = vmatpush1.bf16.msra.mxu0 0
        %448 = vmatprep.subr.bf16.mxu0 0
        %449 = vmatpush1.bf16.msra.mxu0 0
        %450 = vmatprep.subr.bf16.mxu0 0
        %451 = vmatpush1.bf16.msra.mxu0 0
        %452 = vmatprep.mubr.bf16.mxu0 0
        %453 = vmatmul.mubr.bf16.gmra.mrb[0].mxu0 %v256
        %v454 = vpop.f32.mrb[0].mxu0
        %v455 = vadd.f32 0.0, %v454
        %v456 = vpop.f32.mrb[0].mxu0
        %v457 = vadd.f32 0.0, %v456
        %v458 = vpop.f32.mrb[0].mxu0
        %v459 = vadd.f32 0.0, %v458
        %v460 = vpop.f32.mrb[0].mxu0
        %v461 = vadd.f32 0.0, %v460
        %462 = vmatprep.mubr.bf16.mxu0 0
        %463 = vmatmul.mubr.bf16.gmra.mrb[0].mxu0 %v257
        %v464 = vpop.f32.mrb[0].mxu0
        %v465 = vadd.f32 0.0, %v464
        %v466 = vpop.f32.mrb[0].mxu0
        %v467 = vadd.f32 0.0, %v466
        %v468 = vpop.f32.mrb[0].mxu0
        %v469 = vadd.f32 0.0, %v468
        %v470 = vpop.f32.mrb[0].mxu0
        %v471 = vadd.f32 0.0, %v470
        %472 = vmatprep.mubr.bf16.mxu0 0
        %473 = vmatmul.mubr.bf16.gmra.mrb[0].mxu0 %v258
        %v474 = vpop.f32.mrb[0].mxu0
        %v475 = vadd.f32 0.0, %v474
        %v476 = vpop.f32.mrb[0].mxu0
        %v477 = vadd.f32 0.0, %v476
        %v478 = vpop.f32.mrb[0].mxu0
        %v479 = vadd.f32 0.0, %v478
        %v480 = vpop.f32.mrb[0].mxu0
        %v481 = vadd.f32 0.0, %v480
        %482 = vmatprep.mubr.bf16.mxu0 0
        %483 = vmatmul.mubr.bf16.gmra.mrb[0].mxu0 %v259
        %v484 = vpop.f32.mrb[0].mxu0
        %v485 = vadd.f32 0.0, %v484
        %v486 = vpop.f32.mrb[0].mxu0
        %v487 = vadd.f32 0.0, %v486
        %v488 = vpop.f32.mrb[0].mxu0
        %v489 = vadd.f32 0.0, %v488
        %v490 = vpop.f32.mrb[0].mxu0
        %v491 = vadd.f32 0.0, %v490
        %492 = vdwg.mxu0
        %493 = vmatprep.subr.bf16.mxu0 0
        %494 = vmatpush1.bf16.msra.mxu0 %v374
        %495 = vmatprep.subr.bf16.mxu0 0
        %496 = vmatpush1.bf16.msra.mxu0 %v377
        %497 = vmatprep.subr.bf16.mxu0 0
        %498 = vmatpush1.bf16.msra.mxu0 %v380
        %499 = vmatprep.subr.bf16.mxu0 0
        %500 = vmatpush1.bf16.msra.mxu0 %v383
        %501 = vmatprep.subr.bf16.mxu0 0
        %502 = vmatpush1.bf16.msra.mxu0 %v386
        %503 = vmatprep.subr.bf16.mxu0 0
        %504 = vmatpush1.bf16.msra.mxu0 %v389
        %505 = vmatprep.subr.bf16.mxu0 0
        %506 = vmatpush1.bf16.msra.mxu0 %v392
        %507 = vmatprep.subr.bf16.mxu0 0
        %508 = vmatpush1.bf16.msra.mxu0 %v395
        %509 = vmatprep.subr.bf16.mxu0 0
        %510 = vmatpush1.bf16.msra.mxu0 0
        %511 = vmatprep.subr.bf16.mxu0 0
        %512 = vmatpush1.bf16.msra.mxu0 0
        %513 = vmatprep.subr.bf16.mxu0 0
        %514 = vmatpush1.bf16.msra.mxu0 0
        %515 = vmatprep.subr.bf16.mxu0 0
        %516 = vmatpush1.bf16.msra.mxu0 0
        %517 = vmatprep.subr.bf16.mxu0 0
        %518 = vmatpush1.bf16.msra.mxu0 0
        %519 = vmatprep.subr.bf16.mxu0 0
        %520 = vmatpush1.bf16.msra.mxu0 0
        %521 = vmatprep.subr.bf16.mxu0 0
        %522 = vmatpush1.bf16.msra.mxu0 0
        %523 = vmatprep.subr.bf16.mxu0 0
        %524 = vmatpush1.bf16.msra.mxu0 0
        %525 = vmatprep.mubr.bf16.mxu0 0
        %526 = vmatmul.mubr.bf16.gmra.mrb[0].mxu0 %v256
        %v527 = vpop.f32.mrb[0].mxu0
        %v528 = vadd.f32 0.0, %v527
        %v529 = vpop.f32.mrb[0].mxu0
        %v530 = vpop.f32.mrb[0].mxu0
        %v531 = vadd.f32 0.0, %v530
        %v532 = vpop.f32.mrb[0].mxu0
        %533 = vmatprep.mubr.bf16.mxu0 0
        %534 = vmatmul.mubr.bf16.gmra.mrb[0].mxu0 %v257
        %v535 = vpop.f32.mrb[0].mxu0
        %v536 = vadd.f32 0.0, %v535
        %v537 = vpop.f32.mrb[0].mxu0
        %v538 = vpop.f32.mrb[0].mxu0
        %v539 = vadd.f32 0.0, %v538
        %v540 = vpop.f32.mrb[0].mxu0
        %541 = vmatprep.mubr.bf16.mxu0 0
        %542 = vmatmul.mubr.bf16.gmra.mrb[0].mxu0 %v258
        %v543 = vpop.f32.mrb[0].mxu0
        %v544 = vadd.f32 0.0, %v543
        %v545 = vpop.f32.mrb[0].mxu0
        %v546 = vpop.f32.mrb[0].mxu0
        %v547 = vadd.f32 0.0, %v546
        %v548 = vpop.f32.mrb[0].mxu0
        %549 = vmatprep.mubr.bf16.mxu0 0
        %550 = vmatmul.mubr.bf16.gmra.mrb[0].mxu0 %v259
        %v551 = vpop.f32.mrb[0].mxu0
        %v552 = vadd.f32 0.0, %v551
        %v553 = vpop.f32.mrb[0].mxu0
        %v554 = vpop.f32.mrb[0].mxu0
        %v555 = vadd.f32 0.0, %v554
        %v556 = vpop.f32.mrb[0].mxu0
        %557 = vdwg.mxu0
        %v558 = vpack.c.bf16 %v459, %v455
        %v559 = vpack.c.bf16 %v461, %v457
        %v560 = vpack.c.bf16 %v531, %v528
        %v561 = vpack.c.bf16 %v469, %v465
        %v562 = vpack.c.bf16 %v471, %v467
        %v563 = vpack.c.bf16 %v539, %v536
        %v564 = vpack.c.bf16 %v479, %v475
        %v565 = vpack.c.bf16 %v481, %v477
        %v566 = vpack.c.bf16 %v547, %v544
        %v567 = vpack.c.bf16 %v489, %v485
        %v568 = vpack.c.bf16 %v491, %v487
        %v569 = vpack.c.bf16 %v555, %v552
        %570 = vst [vmem:[#allocation2] sm:$0xff] %v558
        %571 = vst [vmem:[#allocation2 + $0x8] sm:$0xff] %v559
        %572 = vst [vmem:[#allocation2 + $0x10] sm:$0xff] %v560
        %573 = vst [vmem:[#allocation2 + $0x18] sm:$0xff] %v561
        %574 = vst [vmem:[#allocation2 + $0x20] sm:$0xff] %v562
        %575 = vst [vmem:[#allocation2 + $0x28] sm:$0xff] %v563
        %576 = vst [vmem:[#allocation2 + $0x30] sm:$0xff] %v564
        %577 = vst [vmem:[#allocation2 + $0x38] sm:$0xff] %v565
        %578 = vst [vmem:[#allocation2 + $0x40] sm:$0xff] %v566
        %579 = vst [vmem:[#allocation2 + $0x48] sm:$0xff] %v567
        %580 = vst [vmem:[#allocation2 + $0x50] sm:$0xff] %v568
        %581 = vst [vmem:[#allocation2 + $0x58] sm:$0xff] %v569
        %v582 = vlaneseq
        %v583 = vshrl.u32 %v582, 7
        %v584 = vadd.s32 %v583, 8
        %v585 = vadd.s32 %v583, 16
        %v586 = vadd.s32 %v583, 24
        %v587 = vadd.s32 %v583, 32
        %v588 = vadd.s32 %v583, 40
        %v589 = vadd.s32 %v583, 48
        %v590 = vadd.s32 %v583, 56
        %v591 = vlaneseq
        %v592 = vand.u32 %v591, 127
        %vm593 = vcmp.le.s32.totalorder %v592, %v583
        %vm594 = vcmp.le.s32.totalorder %v592, %v584
        %vm595 = vcmp.le.s32.totalorder %v592, %v585
        %vm596 = vcmp.le.s32.totalorder %v592, %v586
        %vm597 = vcmp.le.s32.totalorder %v592, %v587
        %vm598 = vcmp.le.s32.totalorder %v592, %v588
        %vm599 = vcmp.le.s32.totalorder %v592, %v589
        %vm600 = vcmp.le.s32.totalorder %v592, %v590
        %v601 = vld [vmem:[#allocation2] sm:$0xff]
        %v602 = vld [vmem:[#allocation2 + $0x18] sm:$0xff]
        %v603 = vld [vmem:[#allocation2 + $0x30] sm:$0xff]
        %v604 = vld [vmem:[#allocation2 + $0x48] sm:$0xff]
        %v605 = vld [vmem:[#allocation2 + $0x8] sm:$0xff]
        %v606 = vld [vmem:[#allocation2 + $0x20] sm:$0xff]
        %v607 = vld [vmem:[#allocation2 + $0x38] sm:$0xff]
        %v608 = vld [vmem:[#allocation2 + $0x50] sm:$0xff]
        %v609 = vld [vmem:[#allocation2 + $0x10] sm:$0xff]
        %v610 = vld [vmem:[#allocation2 + $0x28] sm:$0xff]
        %v611 = vld [vmem:[#allocation2 + $0x40] sm:$0xff]
        %v612 = vld [vmem:[#allocation2 + $0x58] sm:$0xff]
        %vm613 = vcmask 261120
        %v615 = vsel %vm613, %v601, 0
        %v618 = vsel %vm613, %v602, 0
        %v621 = vsel %vm613, %v603, 0
        %v624 = vsel %vm613, %v604, 0
        %v627 = vsel %vm613, %v605, 0
        %v630 = vsel %vm613, %v606, 0
        %v633 = vsel %vm613, %v607, 0
        %v636 = vsel %vm613, %v608, 0
        %638 = vmatprep.subr.bf16.mxu0 0
        %639 = vmatpush1.bf16.xpose.msra.mxu0 %v627
        %640 = vmatprep.subr.bf16.mxu0 0
        %641 = vmatpush1.bf16.xpose.msra.mxu0 %v630
        %642 = vmatprep.subr.bf16.mxu0 0
        %643 = vmatpush1.bf16.xpose.msra.mxu0 %v633
        %644 = vmatprep.subr.bf16.mxu0 0
        %645 = vmatpush1.bf16.xpose.msra.mxu0 %v636
        %646 = vmatprep.subr.bf16.mxu0 0
        %647 = vmatpush1.bf16.xpose.msra.mxu0 0
        %648 = vmatprep.subr.bf16.mxu0 0
        %649 = vmatpush1.bf16.xpose.msra.mxu0 0
        %650 = vmatprep.subr.bf16.mxu0 0
        %651 = vmatpush1.bf16.xpose.msra.mxu0 0
        %652 = vmatprep.subr.bf16.mxu0 0
        %653 = vmatpush1.bf16.xpose.msra.mxu0 0
        %654 = vmatprep.subr.bf16.mxu0 0
        %655 = vmatpush1.bf16.xpose.msra.mxu0 0
        %656 = vmatprep.subr.bf16.mxu0 0
        %657 = vmatpush1.bf16.xpose.msra.mxu0 0
        %658 = vmatprep.subr.bf16.mxu0 0
        %659 = vmatpush1.bf16.xpose.msra.mxu0 0
        %660 = vmatprep.subr.bf16.mxu0 0
        %661 = vmatpush1.bf16.xpose.msra.mxu0 0
        %662 = vmatprep.subr.bf16.mxu0 0
        %663 = vmatpush1.bf16.xpose.msra.mxu0 0
        %664 = vmatprep.subr.bf16.mxu0 0
        %665 = vmatpush1.bf16.xpose.msra.mxu0 0
        %666 = vmatprep.subr.bf16.mxu0 0
        %667 = vmatpush1.bf16.xpose.msra.mxu0 0
        %668 = vmatprep.subr.bf16.mxu0 0
        %669 = vmatpush1.bf16.xpose.msra.mxu0 0
        %670 = vmatprep.mubr.bf16.mxu0 0
        %671 = vmatmul.mubr.bf16.gmra.mrb[0].mxu0 %v615
        %v672 = vpop.f32.mrb[0].mxu0
        %v673 = vadd.f32 0.0, %v672
        %v674 = vpop.f32.mrb[0].mxu0
        %v675 = vpop.f32.mrb[0].mxu0
        %v676 = vadd.f32 0.0, %v675
        %v677 = vpop.f32.mrb[0].mxu0
        %678 = vmatprep.mubr.bf16.mxu0 0
        %679 = vmatmul.mubr.bf16.gmra.mrb[0].mxu0 %v618
        %v680 = vpop.f32.mrb[0].mxu0
        %v681 = vadd.f32 0.0, %v680
        %v682 = vpop.f32.mrb[0].mxu0
        %v683 = vpop.f32.mrb[0].mxu0
        %v684 = vadd.f32 0.0, %v683
        %v685 = vpop.f32.mrb[0].mxu0
        %686 = vmatprep.mubr.bf16.mxu0 0
        %687 = vmatmul.mubr.bf16.gmra.mrb[0].mxu0 %v621
        %v688 = vpop.f32.mrb[0].mxu0
        %v689 = vadd.f32 0.0, %v688
        %v690 = vpop.f32.mrb[0].mxu0
        %v691 = vpop.f32.mrb[0].mxu0
        %v692 = vadd.f32 0.0, %v691
        %v693 = vpop.f32.mrb[0].mxu0
        %694 = vmatprep.mubr.bf16.mxu0 0
        %695 = vmatmul.mubr.bf16.gmra.mrb[0].mxu0 %v624
        %v696 = vpop.f32.mrb[0].mxu0
        %v697 = vadd.f32 0.0, %v696
        %v698 = vpop.f32.mrb[0].mxu0
        %v699 = vpop.f32.mrb[0].mxu0
        %v700 = vadd.f32 0.0, %v699
        %v701 = vpop.f32.mrb[0].mxu0
        %702 = vdwg.mxu0
        %v703 = vsel %vm593, %v673, -inf
        %v704 = vsel %vm594, %v676, -inf
        %v705 = vsel %vm595, %v681, -inf
        %v706 = vsel %vm596, %v684, -inf
        %v707 = vsel %vm597, %v689, -inf
        %v708 = vsel %vm598, %v692, -inf
        %v709 = vsel %vm599, %v697, -inf
        %v710 = vsel %vm600, %v700, -inf
        %vm711 = vcmask 523264
        %v712 = vsel %vm711, %v703, -inf
        %713 = vmax.xlane.f32.xlu0 %v712
        %v714 = vpop.xlane.xlu0 %713
        %v715 = vsel %vm711, %v704, -inf
        %716 = vmax.xlane.f32.xlu0 %v715
        %v717 = vpop.xlane.xlu0 %716
        %v718 = vsel %vm711, %v705, -inf
        %719 = vmax.xlane.f32.xlu0 %v718
        %v720 = vpop.xlane.xlu0 %719
        %v721 = vsel %vm711, %v706, -inf
        %722 = vmax.xlane.f32.xlu0 %v721
        %v723 = vpop.xlane.xlu0 %722
        %v724 = vsel %vm711, %v707, -inf
        %725 = vmax.xlane.f32.xlu0 %v724
        %v726 = vpop.xlane.xlu0 %725
        %v727 = vsel %vm711, %v708, -inf
        %728 = vmax.xlane.f32.xlu0 %v727
        %v729 = vpop.xlane.xlu0 %728
        %v730 = vsel %vm711, %v709, -inf
        %731 = vmax.xlane.f32.xlu0 %v730
        %v732 = vpop.xlane.xlu0 %731
        %v733 = vsel %vm711, %v710, -inf
        %734 = vmax.xlane.f32.xlu0 %v733
        %v735 = vpop.xlane.xlu0 %734
        %v736 = vsub.f32 %v703, %v714
        %v737 = vsub.f32 %v704, %v717
        %v738 = vsub.f32 %v705, %v720
        %v739 = vsub.f32 %v706, %v723
        %v740 = vsub.f32 %v707, %v726
        %v741 = vsub.f32 %v708, %v729
        %v742 = vsub.f32 %v709, %v732
        %v743 = vsub.f32 %v710, %v735
        %v744 = vmul.f32 %v736, 1.442695
        %v745 = vpow.pop %v744
        %v746 = vmul.f32 %v737, 1.442695
        %v747 = vpow.pop %v746
        %v748 = vmul.f32 %v738, 1.442695
        %v749 = vpow.pop %v748
        %v750 = vmul.f32 %v739, 1.442695
        %v751 = vpow.pop %v750
        %v752 = vmul.f32 %v740, 1.442695
        %v753 = vpow.pop %v752
        %v754 = vmul.f32 %v741, 1.442695
        %v755 = vpow.pop %v754
        %v756 = vmul.f32 %v742, 1.442695
        %v757 = vpow.pop %v756
        %v758 = vmul.f32 %v743, 1.442695
        %v759 = vpow.pop %v758
        %v760 = vsel %vm711, %v745, 0.0
        %761 = vadd.xlane.f32.xlu0 %v760
        %v762 = vpop.xlane.xlu0 %761
        %v763 = vsel %vm711, %v747, 0.0
        %764 = vadd.xlane.f32.xlu0 %v763
        %v765 = vpop.xlane.xlu0 %764
        %v766 = vsel %vm711, %v749, 0.0
        %767 = vadd.xlane.f32.xlu0 %v766
        %v768 = vpop.xlane.xlu0 %767
        %v769 = vsel %vm711, %v751, 0.0
        %770 = vadd.xlane.f32.xlu0 %v769
        %v771 = vpop.xlane.xlu0 %770
        %v772 = vsel %vm711, %v753, 0.0
        %773 = vadd.xlane.f32.xlu0 %v772
        %v774 = vpop.xlane.xlu0 %773
        %v775 = vsel %vm711, %v755, 0.0
        %776 = vadd.xlane.f32.xlu0 %v775
        %v777 = vpop.xlane.xlu0 %776
        %v778 = vsel %vm711, %v757, 0.0
        %779 = vadd.xlane.f32.xlu0 %v778
        %v780 = vpop.xlane.xlu0 %779
        %v781 = vsel %vm711, %v759, 0.0
        %782 = vadd.xlane.f32.xlu0 %v781
        %v783 = vpop.xlane.xlu0 %782
        %v784 = vrcp.pop %v762
        %v785 = vrcp.pop %v765
        %v786 = vrcp.pop %v768
        %v787 = vrcp.pop %v771
        %v788 = vrcp.pop %v774
        %v789 = vrcp.pop %v777
        %v790 = vrcp.pop %v780
        %v791 = vrcp.pop %v783
        %v792 = vmul.f32 %v745, %v784
        %v793 = vmul.f32 %v747, %v785
        %v794 = vmul.f32 %v749, %v786
        %v795 = vmul.f32 %v751, %v787
        %v796 = vmul.f32 %v753, %v788
        %v797 = vmul.f32 %v755, %v789
        %v798 = vmul.f32 %v757, %v790
        %v799 = vmul.f32 %v759, %v791
        %v800 = vpack.c.bf16 %v793, %v792
        %v801 = vpack.c.bf16 %v795, %v794
        %v802 = vpack.c.bf16 %v797, %v796
        %v803 = vpack.c.bf16 %v799, %v798
        %v805 = vsel %vm711, %v800, 0
        %v808 = vsel %vm711, %v801, 0
        %v811 = vsel %vm711, %v802, 0
        %v814 = vsel %vm711, %v803, 0
        %816 = vmatprep.subr.bf16.mxu0 0
        %817 = vmatpush1.bf16.msra.mxu0 %v609
        %818 = vmatprep.subr.bf16.mxu0 0
        %819 = vmatpush1.bf16.msra.mxu0 %v610
        %820 = vmatprep.subr.bf16.mxu0 0
        %821 = vmatpush1.bf16.msra.mxu0 %v611
        %822 = vmatprep.subr.bf16.mxu0 0
        %823 = vmatpush1.bf16.msra.mxu0 %v612
        %824 = vmatprep.subr.bf16.mxu0 0
        %825 = vmatpush1.bf16.msra.mxu0 0
        %826 = vmatprep.subr.bf16.mxu0 0
        %827 = vmatpush1.bf16.msra.mxu0 0
        %828 = vmatprep.subr.bf16.mxu0 0
        %829 = vmatpush1.bf16.msra.mxu0 0
        %830 = vmatprep.subr.bf16.mxu0 0
        %831 = vmatpush1.bf16.msra.mxu0 0
        %832 = vmatprep.subr.bf16.mxu0 0
        %833 = vmatpush1.bf16.msra.mxu0 0
        %834 = vmatprep.subr.bf16.mxu0 0
        %835 = vmatpush1.bf16.msra.mxu0 0
        %836 = vmatprep.subr.bf16.mxu0 0
        %837 = vmatpush1.bf16.msra.mxu0 0
        %838 = vmatprep.subr.bf16.mxu0 0
        %839 = vmatpush1.bf16.msra.mxu0 0
        %840 = vmatprep.subr.bf16.mxu0 0
        %841 = vmatpush1.bf16.msra.mxu0 0
        %842 = vmatprep.subr.bf16.mxu0 0
        %843 = vmatpush1.bf16.msra.mxu0 0
        %844 = vmatprep.subr.bf16.mxu0 0
        %845 = vmatpush1.bf16.msra.mxu0 0
        %846 = vmatprep.subr.bf16.mxu0 0
        %847 = vmatpush1.bf16.msra.mxu0 0
        %848 = vmatprep.mubr.bf16.mxu0 0
        %849 = vmatmul.mubr.bf16.gmra.mrb[0].mxu0 %v805
        %v850 = vpop.f32.mrb[0].mxu0
        %v851 = vadd.f32 0.0, %v850
        %v852 = vpop.f32.mrb[0].mxu0
        %v853 = vpop.f32.mrb[0].mxu0
        %v854 = vadd.f32 0.0, %v853
        %v855 = vpop.f32.mrb[0].mxu0
        %856 = vmatprep.mubr.bf16.mxu0 0
        %857 = vmatmul.mubr.bf16.gmra.mrb[0].mxu0 %v808
        %v858 = vpop.f32.mrb[0].mxu0
        %v859 = vadd.f32 0.0, %v858
        %v860 = vpop.f32.mrb[0].mxu0
        %v861 = vpop.f32.mrb[0].mxu0
        %v862 = vadd.f32 0.0, %v861
        %v863 = vpop.f32.mrb[0].mxu0
        %864 = vmatprep.mubr.bf16.mxu0 0
        %865 = vmatmul.mubr.bf16.gmra.mrb[0].mxu0 %v811
        %v866 = vpop.f32.mrb[0].mxu0
        %v867 = vadd.f32 0.0, %v866
        %v868 = vpop.f32.mrb[0].mxu0
        %v869 = vpop.f32.mrb[0].mxu0
        %v870 = vadd.f32 0.0, %v869
        %v871 = vpop.f32.mrb[0].mxu0
        %872 = vmatprep.mubr.bf16.mxu0 0
        %873 = vmatmul.mubr.bf16.gmra.mrb[0].mxu0 %v814
        %v874 = vpop.f32.mrb[0].mxu0
        %v875 = vadd.f32 0.0, %v874
        %v876 = vpop.f32.mrb[0].mxu0
        %v877 = vpop.f32.mrb[0].mxu0
        %v878 = vadd.f32 0.0, %v877
        %v879 = vpop.f32.mrb[0].mxu0
        %880 = vdwg.mxu0
        %v881 = vpack.c.bf16 %v854, %v851
        %v882 = vpack.c.bf16 %v862, %v859
        %v883 = vpack.c.bf16 %v870, %v867
        %v884 = vpack.c.bf16 %v878, %v875
        %885 = vst.msk [vmem:[#allocation3] sm:$0xff] %vm613, %v881
        %886 = vst.msk [vmem:[#allocation3 + $0x8] sm:$0xff] %vm613, %v882
        %887 = vst.msk [vmem:[#allocation3 + $0x10] sm:$0xff] %vm613, %v883
        %888 = vst.msk [vmem:[#allocation3 + $0x18] sm:$0xff] %vm613, %v884
        %v889 = vld [vmem:[#allocation2] sm:$0xff]
        %v890 = vld [vmem:[#allocation2 + $0x18] sm:$0xff]
        %v891 = vld [vmem:[#allocation2 + $0x30] sm:$0xff]
        %v892 = vld [vmem:[#allocation2 + $0x48] sm:$0xff]
        %v893 = vld [vmem:[#allocation2 + $0x8] sm:$0xff]
        %v894 = vld [vmem:[#allocation2 + $0x20] sm:$0xff]
        %v895 = vld [vmem:[#allocation2 + $0x38] sm:$0xff]
        %v896 = vld [vmem:[#allocation2 + $0x50] sm:$0xff]
        %v897 = vld [vmem:[#allocation2 + $0x10] sm:$0xff]
        %v898 = vld [vmem:[#allocation2 + $0x28] sm:$0xff]
        %v899 = vld [vmem:[#allocation2 + $0x40] sm:$0xff]
        %v900 = vld [vmem:[#allocation2 + $0x58] sm:$0xff]
        %905 = vrot.lane.b32.xlu0 %v889, 96
        %v906 = vpop.permute.xlu0 %905
        %907 = vrot.lane.b32.xlu0 %v890, 96
        %v908 = vpop.permute.xlu0 %907
        %909 = vrot.lane.b32.xlu0 %v891, 96
        %v910 = vpop.permute.xlu0 %909
        %911 = vrot.lane.b32.xlu0 %v892, 96
        %v912 = vpop.permute.xlu0 %911
        %917 = vrot.lane.b32.xlu0 %v893, 96
        %v918 = vpop.permute.xlu0 %917
        %919 = vrot.lane.b32.xlu0 %v894, 96
        %v920 = vpop.permute.xlu0 %919
        %921 = vrot.lane.b32.xlu0 %v895, 96
        %v922 = vpop.permute.xlu0 %921
        %923 = vrot.lane.b32.xlu0 %v896, 96
        %v924 = vpop.permute.xlu0 %923
        %v926 = vsel %vm613, %v906, 0
        %v929 = vsel %vm613, %v908, 0
        %v932 = vsel %vm613, %v910, 0
        %v935 = vsel %vm613, %v912, 0
        %v938 = vsel %vm613, %v918, 0
        %v941 = vsel %vm613, %v920, 0
        %v944 = vsel %vm613, %v922, 0
        %v947 = vsel %vm613, %v924, 0
        %949 = vmatprep.subr.bf16.mxu0 0
        %950 = vmatpush1.bf16.xpose.msra.mxu0 %v938
        %951 = vmatprep.subr.bf16.mxu0 0
        %952 = vmatpush1.bf16.xpose.msra.mxu0 %v941
        %953 = vmatprep.subr.bf16.mxu0 0
        %954 = vmatpush1.bf16.xpose.msra.mxu0 %v944
        %955 = vmatprep.subr.bf16.mxu0 0
        %956 = vmatpush1.bf16.xpose.msra.mxu0 %v947
        %957 = vmatprep.subr.bf16.mxu0 0
        %958 = vmatpush1.bf16.xpose.msra.mxu0 0
        %959 = vmatprep.subr.bf16.mxu0 0
        %960 = vmatpush1.bf16.xpose.msra.mxu0 0
        %961 = vmatprep.subr.bf16.mxu0 0
        %962 = vmatpush1.bf16.xpose.msra.mxu0 0
        %963 = vmatprep.subr.bf16.mxu0 0
        %964 = vmatpush1.bf16.xpose.msra.mxu0 0
        %965 = vmatprep.subr.bf16.mxu0 0
        %966 = vmatpush1.bf16.xpose.msra.mxu0 0
        %967 = vmatprep.subr.bf16.mxu0 0
        %968 = vmatpush1.bf16.xpose.msra.mxu0 0
        %969 = vmatprep.subr.bf16.mxu0 0
        %970 = vmatpush1.bf16.xpose.msra.mxu0 0
        %971 = vmatprep.subr.bf16.mxu0 0
        %972 = vmatpush1.bf16.xpose.msra.mxu0 0
        %973 = vmatprep.subr.bf16.mxu0 0
        %974 = vmatpush1.bf16.xpose.msra.mxu0 0
        %975 = vmatprep.subr.bf16.mxu0 0
        %976 = vmatpush1.bf16.xpose.msra.mxu0 0
        %977 = vmatprep.subr.bf16.mxu0 0
        %978 = vmatpush1.bf16.xpose.msra.mxu0 0
        %979 = vmatprep.subr.bf16.mxu0 0
        %980 = vmatpush1.bf16.xpose.msra.mxu0 0
        %981 = vmatprep.mubr.bf16.mxu0 0
        %982 = vmatmul.mubr.bf16.gmra.mrb[0].mxu0 %v926
        %v983 = vpop.f32.mrb[0].mxu0
        %v984 = vadd.f32 0.0, %v983
        %v985 = vpop.f32.mrb[0].mxu0
        %v986 = vpop.f32.mrb[0].mxu0
        %v987 = vadd.f32 0.0, %v986
        %v988 = vpop.f32.mrb[0].mxu0
        %989 = vmatprep.mubr.bf16.mxu0 0
        %990 = vmatmul.mubr.bf16.gmra.mrb[0].mxu0 %v929
        %v991 = vpop.f32.mrb[0].mxu0
        %v992 = vadd.f32 0.0, %v991
        %v993 = vpop.f32.mrb[0].mxu0
        %v994 = vpop.f32.mrb[0].mxu0
        %v995 = vadd.f32 0.0, %v994
        %v996 = vpop.f32.mrb[0].mxu0
        %997 = vmatprep.mubr.bf16.mxu0 0
        %998 = vmatmul.mubr.bf16.gmra.mrb[0].mxu0 %v932
        %v999 = vpop.f32.mrb[0].mxu0
        %v1000 = vadd.f32 0.0, %v999
        %v1001 = vpop.f32.mrb[0].mxu0
        %v1002 = vpop.f32.mrb[0].mxu0
        %v1003 = vadd.f32 0.0, %v1002
        %v1004 = vpop.f32.mrb[0].mxu0
        %1005 = vmatprep.mubr.bf16.mxu0 0
        %1006 = vmatmul.mubr.bf16.gmra.mrb[0].mxu0 %v935
        %v1007 = vpop.f32.mrb[0].mxu0
        %v1008 = vadd.f32 0.0, %v1007
        %v1009 = vpop.f32.mrb[0].mxu0
        %v1010 = vpop.f32.mrb[0].mxu0
        %v1011 = vadd.f32 0.0, %v1010
        %v1012 = vpop.f32.mrb[0].mxu0
        %1013 = vdwg.mxu0
        %v1014 = vsel %vm593, %v984, -inf
        %v1015 = vsel %vm594, %v987, -inf
        %v1016 = vsel %vm595, %v992, -inf
        %v1017 = vsel %vm596, %v995, -inf
        %v1018 = vsel %vm597, %v1000, -inf
        %v1019 = vsel %vm598, %v1003, -inf
        %v1020 = vsel %vm599, %v1008, -inf
        %v1021 = vsel %vm600, %v1011, -inf
        %v1022 = vsel %vm711, %v1014, -inf
        %1023 = vmax.xlane.f32.xlu0 %v1022
        %v1024 = vpop.xlane.xlu0 %1023
        %v1025 = vsel %vm711, %v1015, -inf
        %1026 = vmax.xlane.f32.xlu0 %v1025
        %v1027 = vpop.xlane.xlu0 %1026
        %v1028 = vsel %vm711, %v1016, -inf
        %1029 = vmax.xlane.f32.xlu0 %v1028
        %v1030 = vpop.xlane.xlu0 %1029
        %v1031 = vsel %vm711, %v1017, -inf
        %1032 = vmax.xlane.f32.xlu0 %v1031
        %v1033 = vpop.xlane.xlu0 %1032
        %v1034 = vsel %vm711, %v1018, -inf
        %1035 = vmax.xlane.f32.xlu0 %v1034
        %v1036 = vpop.xlane.xlu0 %1035
        %v1037 = vsel %vm711, %v1019, -inf
        %1038 = vmax.xlane.f32.xlu0 %v1037
        %v1039 = vpop.xlane.xlu0 %1038
        %v1040 = vsel %vm711, %v1020, -inf
        %1041 = vmax.xlane.f32.xlu0 %v1040
        %v1042 = vpop.xlane.xlu0 %1041
        %v1043 = vsel %vm711, %v1021, -inf
        %1044 = vmax.xlane.f32.xlu0 %v1043
        %v1045 = vpop.xlane.xlu0 %1044
        %v1046 = vsub.f32 %v1014, %v1024
        %v1047 = vsub.f32 %v1015, %v1027
        %v1048 = vsub.f32 %v1016, %v1030
        %v1049 = vsub.f32 %v1017, %v1033
        %v1050 = vsub.f32 %v1018, %v1036
        %v1051 = vsub.f32 %v1019, %v1039
        %v1052 = vsub.f32 %v1020, %v1042
        %v1053 = vsub.f32 %v1021, %v1045
        %v1054 = vmul.f32 %v1046, 1.442695
        %v1055 = vpow.pop %v1054
        %v1056 = vmul.f32 %v1047, 1.442695
        %v1057 = vpow.pop %v1056
        %v1058 = vmul.f32 %v1048, 1.442695
        %v1059 = vpow.pop %v1058
        %v1060 = vmul.f32 %v1049, 1.442695
        %v1061 = vpow.pop %v1060
        %v1062 = vmul.f32 %v1050, 1.442695
        %v1063 = vpow.pop %v1062
        %v1064 = vmul.f32 %v1051, 1.442695
        %v1065 = vpow.pop %v1064
        %v1066 = vmul.f32 %v1052, 1.442695
        %v1067 = vpow.pop %v1066
        %v1068 = vmul.f32 %v1053, 1.442695
        %v1069 = vpow.pop %v1068
        %v1070 = vsel %vm711, %v1055, 0.0
        %1071 = vadd.xlane.f32.xlu0 %v1070
        %v1072 = vpop.xlane.xlu0 %1071
        %v1073 = vsel %vm711, %v1057, 0.0
        %1074 = vadd.xlane.f32.xlu0 %v1073
        %v1075 = vpop.xlane.xlu0 %1074
        %v1076 = vsel %vm711, %v1059, 0.0
        %1077 = vadd.xlane.f32.xlu0 %v1076
        %v1078 = vpop.xlane.xlu0 %1077
        %v1079 = vsel %vm711, %v1061, 0.0
        %1080 = vadd.xlane.f32.xlu0 %v1079
        %v1081 = vpop.xlane.xlu0 %1080
        %v1082 = vsel %vm711, %v1063, 0.0
        %1083 = vadd.xlane.f32.xlu0 %v1082
        %v1084 = vpop.xlane.xlu0 %1083
        %v1085 = vsel %vm711, %v1065, 0.0
        %1086 = vadd.xlane.f32.xlu0 %v1085
        %v1087 = vpop.xlane.xlu0 %1086
        %v1088 = vsel %vm711, %v1067, 0.0
        %1089 = vadd.xlane.f32.xlu0 %v1088
        %v1090 = vpop.xlane.xlu0 %1089
        %v1091 = vsel %vm711, %v1069, 0.0
        %1092 = vadd.xlane.f32.xlu0 %v1091
        %v1093 = vpop.xlane.xlu0 %1092
        %v1094 = vrcp.pop %v1072
        %v1095 = vrcp.pop %v1075
        %v1096 = vrcp.pop %v1078
        %v1097 = vrcp.pop %v1081
        %v1098 = vrcp.pop %v1084
        %v1099 = vrcp.pop %v1087
        %v1100 = vrcp.pop %v1090
        %v1101 = vrcp.pop %v1093
        %v1102 = vmul.f32 %v1055, %v1094
        %v1103 = vmul.f32 %v1057, %v1095
        %v1104 = vmul.f32 %v1059, %v1096
        %v1105 = vmul.f32 %v1061, %v1097
        %v1106 = vmul.f32 %v1063, %v1098
        %v1107 = vmul.f32 %v1065, %v1099
        %v1108 = vmul.f32 %v1067, %v1100
        %v1109 = vmul.f32 %v1069, %v1101
        %v1110 = vpack.c.bf16 %v1103, %v1102
        %v1111 = vpack.c.bf16 %v1105, %v1104
        %v1112 = vpack.c.bf16 %v1107, %v1106
        %v1113 = vpack.c.bf16 %v1109, %v1108
        %1118 = vrot.lane.b32.xlu0 %v897, 96
        %v1119 = vpop.permute.xlu0 %1118
        %1120 = vrot.lane.b32.xlu0 %v898, 96
        %v1121 = vpop.permute.xlu0 %1120
        %1122 = vrot.lane.b32.xlu0 %v899, 96
        %v1123 = vpop.permute.xlu0 %1122
        %1124 = vrot.lane.b32.xlu0 %v900, 96
        %v1125 = vpop.permute.xlu0 %1124
        %v1131 = vsel %vm711, %v1110, 0
        %v1134 = vsel %vm711, %v1111, 0
        %v1137 = vsel %vm711, %v1112, 0
        %v1140 = vsel %vm711, %v1113, 0
        %1142 = vmatprep.subr.bf16.mxu0 0
        %1143 = vmatpush1.bf16.msra.mxu0 %v1119
        %1144 = vmatprep.subr.bf16.mxu0 0
        %1145 = vmatpush1.bf16.msra.mxu0 %v1121
        %1146 = vmatprep.subr.bf16.mxu0 0
        %1147 = vmatpush1.bf16.msra.mxu0 %v1123
        %1148 = vmatprep.subr.bf16.mxu0 0
        %1149 = vmatpush1.bf16.msra.mxu0 %v1125
        %1150 = vmatprep.subr.bf16.mxu0 0
        %1151 = vmatpush1.bf16.msra.mxu0 0
        %1152 = vmatprep.subr.bf16.mxu0 0
        %1153 = vmatpush1.bf16.msra.mxu0 0
        %1154 = vmatprep.subr.bf16.mxu0 0
        %1155 = vmatpush1.bf16.msra.mxu0 0
        %1156 = vmatprep.subr.bf16.mxu0 0
        %1157 = vmatpush1.bf16.msra.mxu0 0
        %1158 = vmatprep.subr.bf16.mxu0 0
        %1159 = vmatpush1.bf16.msra.mxu0 0
        %1160 = vmatprep.subr.bf16.mxu0 0
        %1161 = vmatpush1.bf16.msra.mxu0 0
        %1162 = vmatprep.subr.bf16.mxu0 0
        %1163 = vmatpush1.bf16.msra.mxu0 0
        %1164 = vmatprep.subr.bf16.mxu0 0
        %1165 = vmatpush1.bf16.msra.mxu0 0
        %1166 = vmatprep.subr.bf16.mxu0 0
        %1167 = vmatpush1.bf16.msra.mxu0 0
        %1168 = vmatprep.subr.bf16.mxu0 0
        %1169 = vmatpush1.bf16.msra.mxu0 0
        %1170 = vmatprep.subr.bf16.mxu0 0
        %1171 = vmatpush1.bf16.msra.mxu0 0
        %1172 = vmatprep.subr.bf16.mxu0 0
        %1173 = vmatpush1.bf16.msra.mxu0 0
        %1174 = vmatprep.mubr.bf16.mxu0 0
        %1175 = vmatmul.mubr.bf16.gmra.mrb[0].mxu0 %v1131
        %v1176 = vpop.f32.mrb[0].mxu0
        %v1177 = vadd.f32 0.0, %v1176
        %v1178 = vpop.f32.mrb[0].mxu0
        %v1179 = vpop.f32.mrb[0].mxu0
        %v1180 = vadd.f32 0.0, %v1179
        %v1181 = vpop.f32.mrb[0].mxu0
        %1182 = vmatprep.mubr.bf16.mxu0 0
        %1183 = vmatmul.mubr.bf16.gmra.mrb[0].mxu0 %v1134
        %v1184 = vpop.f32.mrb[0].mxu0
        %v1185 = vadd.f32 0.0, %v1184
        %v1186 = vpop.f32.mrb[0].mxu0
        %v1187 = vpop.f32.mrb[0].mxu0
        %v1188 = vadd.f32 0.0, %v1187
        %v1189 = vpop.f32.mrb[0].mxu0
        %1190 = vmatprep.mubr.bf16.mxu0 0
        %1191 = vmatmul.mubr.bf16.gmra.mrb[0].mxu0 %v1137
        %v1192 = vpop.f32.mrb[0].mxu0
        %v1193 = vadd.f32 0.0, %v1192
        %v1194 = vpop.f32.mrb[0].mxu0
        %v1195 = vpop.f32.mrb[0].mxu0
        %v1196 = vadd.f32 0.0, %v1195
        %v1197 = vpop.f32.mrb[0].mxu0
        %1198 = vmatprep.mubr.bf16.mxu0 0
        %1199 = vmatmul.mubr.bf16.gmra.mrb[0].mxu0 %v1140
        %v1200 = vpop.f32.mrb[0].mxu0
        %v1201 = vadd.f32 0.0, %v1200
        %v1202 = vpop.f32.mrb[0].mxu0
        %v1203 = vpop.f32.mrb[0].mxu0
        %v1204 = vadd.f32 0.0, %v1203
        %v1205 = vpop.f32.mrb[0].mxu0
        %1206 = vdwg.mxu0
        %v1207 = vpack.c.bf16 %v1180, %v1177
        %v1208 = vpack.c.bf16 %v1188, %v1185
        %v1209 = vpack.c.bf16 %v1196, %v1193
        %v1210 = vpack.c.bf16 %v1204, %v1201
        %1215 = vrot.lane.b32.xlu0 %v1207, 32
        %v1216 = vpop.permute.xlu0 %1215
        %1217 = vrot.lane.b32.xlu0 %v1208, 32
        %v1218 = vpop.permute.xlu0 %1217
        %1219 = vrot.lane.b32.xlu0 %v1209, 32
        %v1220 = vpop.permute.xlu0 %1219
        %1221 = vrot.lane.b32.xlu0 %v1210, 32
        %v1222 = vpop.permute.xlu0 %1221
        %vm1227 = vcmask 523520
        %1228 = vst.msk [vmem:[#allocation3] sm:$0xff] %vm1227, %v1216
        %1229 = vst.msk [vmem:[#allocation3 + $0x8] sm:$0xff] %vm1227, %v1218
        %1230 = vst.msk [vmem:[#allocation3 + $0x10] sm:$0xff] %vm1227, %v1220
        %1231 = vst.msk [vmem:[#allocation3 + $0x18] sm:$0xff] %vm1227, %v1222
        %v1232 = vld [vmem:[#allocation2] sm:$0xff]
        %v1233 = vld [vmem:[#allocation2 + $0x18] sm:$0xff]
        %v1234 = vld [vmem:[#allocation2 + $0x30] sm:$0xff]
        %v1235 = vld [vmem:[#allocation2 + $0x48] sm:$0xff]
        %v1236 = vld [vmem:[#allocation2 + $0x8] sm:$0xff]
        %v1237 = vld [vmem:[#allocation2 + $0x20] sm:$0xff]
        %v1238 = vld [vmem:[#allocation2 + $0x38] sm:$0xff]
        %v1239 = vld [vmem:[#allocation2 + $0x50] sm:$0xff]
        %v1240 = vld [vmem:[#allocation2 + $0x10] sm:$0xff]
        %v1241 = vld [vmem:[#allocation2 + $0x28] sm:$0xff]
        %v1242 = vld [vmem:[#allocation2 + $0x40] sm:$0xff]
        %v1243 = vld [vmem:[#allocation2 + $0x58] sm:$0xff]
        %1248 = vrot.lane.b32.xlu0 %v1232, 64
        %v1249 = vpop.permute.xlu0 %1248
        %1250 = vrot.lane.b32.xlu0 %v1233, 64
        %v1251 = vpop.permute.xlu0 %1250
        %1252 = vrot.lane.b32.xlu0 %v1234, 64
        %v1253 = vpop.permute.xlu0 %1252
        %1254 = vrot.lane.b32.xlu0 %v1235, 64
        %v1255 = vpop.permute.xlu0 %1254
        %1260 = vrot.lane.b32.xlu0 %v1236, 64
        %v1261 = vpop.permute.xlu0 %1260
        %1262 = vrot.lane.b32.xlu0 %v1237, 64
        %v1263 = vpop.permute.xlu0 %1262
        %1264 = vrot.lane.b32.xlu0 %v1238, 64
        %v1265 = vpop.permute.xlu0 %1264
        %1266 = vrot.lane.b32.xlu0 %v1239, 64
        %v1267 = vpop.permute.xlu0 %1266
        %v1269 = vsel %vm613, %v1249, 0
        %v1272 = vsel %vm613, %v1251, 0
        %v1275 = vsel %vm613, %v1253, 0
        %v1278 = vsel %vm613, %v1255, 0
        %v1281 = vsel %vm613, %v1261, 0
        %v1284 = vsel %vm613, %v1263, 0
        %v1287 = vsel %vm613, %v1265, 0
        %v1290 = vsel %vm613, %v1267, 0
        %1292 = vmatprep.subr.bf16.mxu0 0
        %1293 = vmatpush1.bf16.xpose.msra.mxu0 %v1281
        %1294 = vmatprep.subr.bf16.mxu0 0
        %1295 = vmatpush1.bf16.xpose.msra.mxu0 %v1284
        %1296 = vmatprep.subr.bf16.mxu0 0
        %1297 = vmatpush1.bf16.xpose.msra.mxu0 %v1287
        %1298 = vmatprep.subr.bf16.mxu0 0
        %1299 = vmatpush1.bf16.xpose.msra.mxu0 %v1290
        %1300 = vmatprep.subr.bf16.mxu0 0
        %1301 = vmatpush1.bf16.xpose.msra.mxu0 0
        %1302 = vmatprep.subr.bf16.mxu0 0
        %1303 = vmatpush1.bf16.xpose.msra.mxu0 0
        %1304 = vmatprep.subr.bf16.mxu0 0
        %1305 = vmatpush1.bf16.xpose.msra.mxu0 0
        %1306 = vmatprep.subr.bf16.mxu0 0
        %1307 = vmatpush1.bf16.xpose.msra.mxu0 0
        %1308 = vmatprep.subr.bf16.mxu0 0
        %1309 = vmatpush1.bf16.xpose.msra.mxu0 0
        %1310 = vmatprep.subr.bf16.mxu0 0
        %1311 = vmatpush1.bf16.xpose.msra.mxu0 0
        %1312 = vmatprep.subr.bf16.mxu0 0
        %1313 = vmatpush1.bf16.xpose.msra.mxu0 0
        %1314 = vmatprep.subr.bf16.mxu0 0
        %1315 = vmatpush1.bf16.xpose.msra.mxu0 0
        %1316 = vmatprep.subr.bf16.mxu0 0
        %1317 = vmatpush1.bf16.xpose.msra.mxu0 0
        %1318 = vmatprep.subr.bf16.mxu0 0
        %1319 = vmatpush1.bf16.xpose.msra.mxu0 0
        %1320 = vmatprep.subr.bf16.mxu0 0
        %1321 = vmatpush1.bf16.xpose.msra.mxu0 0
        %1322 = vmatprep.subr.bf16.mxu0 0
        %1323 = vmatpush1.bf16.xpose.msra.mxu0 0
        %1324 = vmatprep.mubr.bf16.mxu0 0
        %1325 = vmatmul.mubr.bf16.gmra.mrb[0].mxu0 %v1269
        %v1326 = vpop.f32.mrb[0].mxu0
        %v1327 = vadd.f32 0.0, %v1326
        %v1328 = vpop.f32.mrb[0].mxu0
        %v1329 = vpop.f32.mrb[0].mxu0
        %v1330 = vadd.f32 0.0, %v1329
        %v1331 = vpop.f32.mrb[0].mxu0
        %1332 = vmatprep.mubr.bf16.mxu0 0
        %1333 = vmatmul.mubr.bf16.gmra.mrb[0].mxu0 %v1272
        %v1334 = vpop.f32.mrb[0].mxu0
        %v1335 = vadd.f32 0.0, %v1334
        %v1336 = vpop.f32.mrb[0].mxu0
        %v1337 = vpop.f32.mrb[0].mxu0
        %v1338 = vadd.f32 0.0, %v1337
        %v1339 = vpop.f32.mrb[0].mxu0
        %1340 = vmatprep.mubr.bf16.mxu0 0
        %1341 = vmatmul.mubr.bf16.gmra.mrb[0].mxu0 %v1275
        %v1342 = vpop.f32.mrb[0].mxu0
        %v1343 = vadd.f32 0.0, %v1342
        %v1344 = vpop.f32.mrb[0].mxu0
        %v1345 = vpop.f32.mrb[0].mxu0
        %v1346 = vadd.f32 0.0, %v1345
        %v1347 = vpop.f32.mrb[0].mxu0
        %1348 = vmatprep.mubr.bf16.mxu0 0
        %1349 = vmatmul.mubr.bf16.gmra.mrb[0].mxu0 %v1278
        %v1350 = vpop.f32.mrb[0].mxu0
        %v1351 = vadd.f32 0.0, %v1350
        %v1352 = vpop.f32.mrb[0].mxu0
        %v1353 = vpop.f32.mrb[0].mxu0
        %v1354 = vadd.f32 0.0, %v1353
        %v1355 = vpop.f32.mrb[0].mxu0
        %1356 = vdwg.mxu0
        %v1357 = vsel %vm593, %v1327, -inf
        %v1358 = vsel %vm594, %v1330, -inf
        %v1359 = vsel %vm595, %v1335, -inf
        %v1360 = vsel %vm596, %v1338, -inf
        %v1361 = vsel %vm597, %v1343, -inf
        %v1362 = vsel %vm598, %v1346, -inf
        %v1363 = vsel %vm599, %v1351, -inf
        %v1364 = vsel %vm600, %v1354, -inf
        %v1365 = vsel %vm711, %v1357, -inf
        %1366 = vmax.xlane.f32.xlu0 %v1365
        %v1367 = vpop.xlane.xlu0 %1366
        %v1368 = vsel %vm711, %v1358, -inf
        %1369 = vmax.xlane.f32.xlu0 %v1368
        %v1370 = vpop.xlane.xlu0 %1369
        %v1371 = vsel %vm711, %v1359, -inf
        %1372 = vmax.xlane.f32.xlu0 %v1371
        %v1373 = vpop.xlane.xlu0 %1372
        %v1374 = vsel %vm711, %v1360, -inf
        %1375 = vmax.xlane.f32.xlu0 %v1374
        %v1376 = vpop.xlane.xlu0 %1375
        %v1377 = vsel %vm711, %v1361, -inf
        %1378 = vmax.xlane.f32.xlu0 %v1377
        %v1379 = vpop.xlane.xlu0 %1378
        %v1380 = vsel %vm711, %v1362, -inf
        %1381 = vmax.xlane.f32.xlu0 %v1380
        %v1382 = vpop.xlane.xlu0 %1381
        %v1383 = vsel %vm711, %v1363, -inf
        %1384 = vmax.xlane.f32.xlu0 %v1383
        %v1385 = vpop.xlane.xlu0 %1384
        %v1386 = vsel %vm711, %v1364, -inf
        %1387 = vmax.xlane.f32.xlu0 %v1386
        %v1388 = vpop.xlane.xlu0 %1387
        %v1389 = vsub.f32 %v1357, %v1367
        %v1390 = vsub.f32 %v1358, %v1370
        %v1391 = vsub.f32 %v1359, %v1373
        %v1392 = vsub.f32 %v1360, %v1376
        %v1393 = vsub.f32 %v1361, %v1379
        %v1394 = vsub.f32 %v1362, %v1382
        %v1395 = vsub.f32 %v1363, %v1385
        %v1396 = vsub.f32 %v1364, %v1388
        %v1397 = vmul.f32 %v1389, 1.442695
        %v1398 = vpow.pop %v1397
        %v1399 = vmul.f32 %v1390, 1.442695
        %v1400 = vpow.pop %v1399
        %v1401 = vmul.f32 %v1391, 1.442695
        %v1402 = vpow.pop %v1401
        %v1403 = vmul.f32 %v1392, 1.442695
        %v1404 = vpow.pop %v1403
        %v1405 = vmul.f32 %v1393, 1.442695
        %v1406 = vpow.pop %v1405
        %v1407 = vmul.f32 %v1394, 1.442695
        %v1408 = vpow.pop %v1407
        %v1409 = vmul.f32 %v1395, 1.442695
        %v1410 = vpow.pop %v1409
        %v1411 = vmul.f32 %v1396, 1.442695
        %v1412 = vpow.pop %v1411
        %v1413 = vsel %vm711, %v1398, 0.0
        %1414 = vadd.xlane.f32.xlu0 %v1413
        %v1415 = vpop.xlane.xlu0 %1414
        %v1416 = vsel %vm711, %v1400, 0.0
        %1417 = vadd.xlane.f32.xlu0 %v1416
        %v1418 = vpop.xlane.xlu0 %1417
        %v1419 = vsel %vm711, %v1402, 0.0
        %1420 = vadd.xlane.f32.xlu0 %v1419
        %v1421 = vpop.xlane.xlu0 %1420
        %v1422 = vsel %vm711, %v1404, 0.0
        %1423 = vadd.xlane.f32.xlu0 %v1422
        %v1424 = vpop.xlane.xlu0 %1423
        %v1425 = vsel %vm711, %v1406, 0.0
        %1426 = vadd.xlane.f32.xlu0 %v1425
        %v1427 = vpop.xlane.xlu0 %1426
        %v1428 = vsel %vm711, %v1408, 0.0
        %1429 = vadd.xlane.f32.xlu0 %v1428
        %v1430 = vpop.xlane.xlu0 %1429
        %v1431 = vsel %vm711, %v1410, 0.0
        %1432 = vadd.xlane.f32.xlu0 %v1431
        %v1433 = vpop.xlane.xlu0 %1432
        %v1434 = vsel %vm711, %v1412, 0.0
        %1435 = vadd.xlane.f32.xlu0 %v1434
        %v1436 = vpop.xlane.xlu0 %1435
        %v1437 = vrcp.pop %v1415
        %v1438 = vrcp.pop %v1418
        %v1439 = vrcp.pop %v1421
        %v1440 = vrcp.pop %v1424
        %v1441 = vrcp.pop %v1427
        %v1442 = vrcp.pop %v1430
        %v1443 = vrcp.pop %v1433
        %v1444 = vrcp.pop %v1436
        %v1445 = vmul.f32 %v1398, %v1437
        %v1446 = vmul.f32 %v1400, %v1438
        %v1447 = vmul.f32 %v1402, %v1439
        %v1448 = vmul.f32 %v1404, %v1440
        %v1449 = vmul.f32 %v1406, %v1441
        %v1450 = vmul.f32 %v1408, %v1442
        %v1451 = vmul.f32 %v1410, %v1443
        %v1452 = vmul.f32 %v1412, %v1444
        %v1453 = vpack.c.bf16 %v1446, %v1445
        %v1454 = vpack.c.bf16 %v1448, %v1447
        %v1455 = vpack.c.bf16 %v1450, %v1449
        %v1456 = vpack.c.bf16 %v1452, %v1451
        %1461 = vrot.lane.b32.xlu0 %v1240, 64
        %v1462 = vpop.permute.xlu0 %1461
        %1463 = vrot.lane.b32.xlu0 %v1241, 64
        %v1464 = vpop.permute.xlu0 %1463
        %1465 = vrot.lane.b32.xlu0 %v1242, 64
        %v1466 = vpop.permute.xlu0 %1465
        %1467 = vrot.lane.b32.xlu0 %v1243, 64
        %v1468 = vpop.permute.xlu0 %1467
        %v1474 = vsel %vm711, %v1453, 0
        %v1477 = vsel %vm711, %v1454, 0
        %v1480 = vsel %vm711, %v1455, 0
        %v1483 = vsel %vm711, %v1456, 0
        %1485 = vmatprep.subr.bf16.mxu0 0
        %1486 = vmatpush1.bf16.msra.mxu0 %v1462
        %1487 = vmatprep.subr.bf16.mxu0 0
        %1488 = vmatpush1.bf16.msra.mxu0 %v1464
        %1489 = vmatprep.subr.bf16.mxu0 0
        %1490 = vmatpush1.bf16.msra.mxu0 %v1466
        %1491 = vmatprep.subr.bf16.mxu0 0
        %1492 = vmatpush1.bf16.msra.mxu0 %v1468
        %1493 = vmatprep.subr.bf16.mxu0 0
        %1494 = vmatpush1.bf16.msra.mxu0 0
        %1495 = vmatprep.subr.bf16.mxu0 0
        %1496 = vmatpush1.bf16.msra.mxu0 0
        %1497 = vmatprep.subr.bf16.mxu0 0
        %1498 = vmatpush1.bf16.msra.mxu0 0
        %1499 = vmatprep.subr.bf16.mxu0 0
        %1500 = vmatpush1.bf16.msra.mxu0 0
        %1501 = vmatprep.subr.bf16.mxu0 0
        %1502 = vmatpush1.bf16.msra.mxu0 0
        %1503 = vmatprep.subr.bf16.mxu0 0
        %1504 = vmatpush1.bf16.msra.mxu0 0
        %1505 = vmatprep.subr.bf16.mxu0 0
        %1506 = vmatpush1.bf16.msra.mxu0 0
        %1507 = vmatprep.subr.bf16.mxu0 0
        %1508 = vmatpush1.bf16.msra.mxu0 0
        %1509 = vmatprep.subr.bf16.mxu0 0
        %1510 = vmatpush1.bf16.msra.mxu0 0
        %1511 = vmatprep.subr.bf16.mxu0 0
        %1512 = vmatpush1.bf16.msra.mxu0 0
        %1513 = vmatprep.subr.bf16.mxu0 0
        %1514 = vmatpush1.bf16.msra.mxu0 0
        %1515 = vmatprep.subr.bf16.mxu0 0
        %1516 = vmatpush1.bf16.msra.mxu0 0
        %1517 = vmatprep.mubr.bf16.mxu0 0
        %1518 = vmatmul.mubr.bf16.gmra.mrb[0].mxu0 %v1474
        %v1519 = vpop.f32.mrb[0].mxu0
        %v1520 = vadd.f32 0.0, %v1519
        %v1521 = vpop.f32.mrb[0].mxu0
        %v1522 = vpop.f32.mrb[0].mxu0
        %v1523 = vadd.f32 0.0, %v1522
        %v1524 = vpop.f32.mrb[0].mxu0
        %1525 = vmatprep.mubr.bf16.mxu0 0
        %1526 = vmatmul.mubr.bf16.gmra.mrb[0].mxu0 %v1477
        %v1527 = vpop.f32.mrb[0].mxu0
        %v1528 = vadd.f32 0.0, %v1527
        %v1529 = vpop.f32.mrb[0].mxu0
        %v1530 = vpop.f32.mrb[0].mxu0
        %v1531 = vadd.f32 0.0, %v1530
        %v1532 = vpop.f32.mrb[0].mxu0
        %1533 = vmatprep.mubr.bf16.mxu0 0
        %1534 = vmatmul.mubr.bf16.gmra.mrb[0].mxu0 %v1480
        %v1535 = vpop.f32.mrb[0].mxu0
        %v1536 = vadd.f32 0.0, %v1535
        %v1537 = vpop.f32.mrb[0].mxu0
        %v1538 = vpop.f32.mrb[0].mxu0
        %v1539 = vadd.f32 0.0, %v1538
        %v1540 = vpop.f32.mrb[0].mxu0
        %1541 = vmatprep.mubr.bf16.mxu0 0
        %1542 = vmatmul.mubr.bf16.gmra.mrb[0].mxu0 %v1483
        %v1543 = vpop.f32.mrb[0].mxu0
        %v1544 = vadd.f32 0.0, %v1543
        %v1545 = vpop.f32.mrb[0].mxu0
        %v1546 = vpop.f32.mrb[0].mxu0
        %v1547 = vadd.f32 0.0, %v1546
        %v1548 = vpop.f32.mrb[0].mxu0
        %1549 = vdwg.mxu0
        %v1550 = vpack.c.bf16 %v1523, %v1520
        %v1551 = vpack.c.bf16 %v1531, %v1528
        %v1552 = vpack.c.bf16 %v1539, %v1536
        %v1553 = vpack.c.bf16 %v1547, %v1544
        %1558 = vrot.lane.b32.xlu0 %v1550, 64
        %v1559 = vpop.permute.xlu0 %1558
        %1560 = vrot.lane.b32.xlu0 %v1551, 64
        %v1561 = vpop.permute.xlu0 %1560
        %1562 = vrot.lane.b32.xlu0 %v1552, 64
        %v1563 = vpop.permute.xlu0 %1562
        %1564 = vrot.lane.b32.xlu0 %v1553, 64
        %v1565 = vpop.permute.xlu0 %1564
        %vm1570 = vcmask 785920
        %1571 = vst.msk [vmem:[#allocation3] sm:$0xff] %vm1570, %v1559
        %1572 = vst.msk [vmem:[#allocation3 + $0x8] sm:$0xff] %vm1570, %v1561
        %1573 = vst.msk [vmem:[#allocation3 + $0x10] sm:$0xff] %vm1570, %v1563
        %1574 = vst.msk [vmem:[#allocation3 + $0x18] sm:$0xff] %vm1570, %v1565
        %v1575 = vld [vmem:[#allocation2] sm:$0xff]
        %v1576 = vld [vmem:[#allocation2 + $0x18] sm:$0xff]
        %v1577 = vld [vmem:[#allocation2 + $0x30] sm:$0xff]
        %v1578 = vld [vmem:[#allocation2 + $0x48] sm:$0xff]
        %v1579 = vld [vmem:[#allocation2 + $0x8] sm:$0xff]
        %v1580 = vld [vmem:[#allocation2 + $0x20] sm:$0xff]
        %v1581 = vld [vmem:[#allocation2 + $0x38] sm:$0xff]
        %v1582 = vld [vmem:[#allocation2 + $0x50] sm:$0xff]
        %v1583 = vld [vmem:[#allocation2 + $0x10] sm:$0xff]
        %v1584 = vld [vmem:[#allocation2 + $0x28] sm:$0xff]
        %v1585 = vld [vmem:[#allocation2 + $0x40] sm:$0xff]
        %v1586 = vld [vmem:[#allocation2 + $0x58] sm:$0xff]
        %1591 = vrot.lane.b32.xlu0 %v1575, 32
        %v1592 = vpop.permute.xlu0 %1591
        %1593 = vrot.lane.b32.xlu0 %v1576, 32
        %v1594 = vpop.permute.xlu0 %1593
        %1595 = vrot.lane.b32.xlu0 %v1577, 32
        %v1596 = vpop.permute.xlu0 %1595
        %1597 = vrot.lane.b32.xlu0 %v1578, 32
        %v1598 = vpop.permute.xlu0 %1597
        %1603 = vrot.lane.b32.xlu0 %v1579, 32
        %v1604 = vpop.permute.xlu0 %1603
        %1605 = vrot.lane.b32.xlu0 %v1580, 32
        %v1606 = vpop.permute.xlu0 %1605
        %1607 = vrot.lane.b32.xlu0 %v1581, 32
        %v1608 = vpop.permute.xlu0 %1607
        %1609 = vrot.lane.b32.xlu0 %v1582, 32
        %v1610 = vpop.permute.xlu0 %1609
        %v1612 = vsel %vm613, %v1592, 0
        %v1615 = vsel %vm613, %v1594, 0
        %v1618 = vsel %vm613, %v1596, 0
        %v1621 = vsel %vm613, %v1598, 0
        %v1624 = vsel %vm613, %v1604, 0
        %v1627 = vsel %vm613, %v1606, 0
        %v1630 = vsel %vm613, %v1608, 0
        %v1633 = vsel %vm613, %v1610, 0
        %1635 = vmatprep.subr.bf16.mxu0 0
        %1636 = vmatpush1.bf16.xpose.msra.mxu0 %v1624
        %1637 = vmatprep.subr.bf16.mxu0 0
        %1638 = vmatpush1.bf16.xpose.msra.mxu0 %v1627
        %1639 = vmatprep.subr.bf16.mxu0 0
        %1640 = vmatpush1.bf16.xpose.msra.mxu0 %v1630
        %1641 = vmatprep.subr.bf16.mxu0 0
        %1642 = vmatpush1.bf16.xpose.msra.mxu0 %v1633
        %1643 = vmatprep.subr.bf16.mxu0 0
        %1644 = vmatpush1.bf16.xpose.msra.mxu0 0
        %1645 = vmatprep.subr.bf16.mxu0 0
        %1646 = vmatpush1.bf16.xpose.msra.mxu0 0
        %1647 = vmatprep.subr.bf16.mxu0 0
        %1648 = vmatpush1.bf16.xpose.msra.mxu0 0
        %1649 = vmatprep.subr.bf16.mxu0 0
        %1650 = vmatpush1.bf16.xpose.msra.mxu0 0
        %1651 = vmatprep.subr.bf16.mxu0 0
        %1652 = vmatpush1.bf16.xpose.msra.mxu0 0
        %1653 = vmatprep.subr.bf16.mxu0 0
        %1654 = vmatpush1.bf16.xpose.msra.mxu0 0
        %1655 = vmatprep.subr.bf16.mxu0 0
        %1656 = vmatpush1.bf16.xpose.msra.mxu0 0
        %1657 = vmatprep.subr.bf16.mxu0 0
        %1658 = vmatpush1.bf16.xpose.msra.mxu0 0
        %1659 = vmatprep.subr.bf16.mxu0 0
        %1660 = vmatpush1.bf16.xpose.msra.mxu0 0
        %1661 = vmatprep.subr.bf16.mxu0 0
        %1662 = vmatpush1.bf16.xpose.msra.mxu0 0
        %1663 = vmatprep.subr.bf16.mxu0 0
        %1664 = vmatpush1.bf16.xpose.msra.mxu0 0
        %1665 = vmatprep.subr.bf16.mxu0 0
        %1666 = vmatpush1.bf16.xpose.msra.mxu0 0
        %1667 = vmatprep.mubr.bf16.mxu0 0
        %1668 = vmatmul.mubr.bf16.gmra.mrb[0].mxu0 %v1612
        %v1669 = vpop.f32.mrb[0].mxu0
        %v1670 = vadd.f32 0.0, %v1669
        %v1671 = vpop.f32.mrb[0].mxu0
        %v1672 = vpop.f32.mrb[0].mxu0
        %v1673 = vadd.f32 0.0, %v1672
        %v1674 = vpop.f32.mrb[0].mxu0
        %1675 = vmatprep.mubr.bf16.mxu0 0
        %1676 = vmatmul.mubr.bf16.gmra.mrb[0].mxu0 %v1615
        %v1677 = vpop.f32.mrb[0].mxu0
        %v1678 = vadd.f32 0.0, %v1677
        %v1679 = vpop.f32.mrb[0].mxu0
        %v1680 = vpop.f32.mrb[0].mxu0
        %v1681 = vadd.f32 0.0, %v1680
        %v1682 = vpop.f32.mrb[0].mxu0
        %1683 = vmatprep.mubr.bf16.mxu0 0
        %1684 = vmatmul.mubr.bf16.gmra.mrb[0].mxu0 %v1618
        %v1685 = vpop.f32.mrb[0].mxu0
        %v1686 = vadd.f32 0.0, %v1685
        %v1687 = vpop.f32.mrb[0].mxu0
        %v1688 = vpop.f32.mrb[0].mxu0
        %v1689 = vadd.f32 0.0, %v1688
        %v1690 = vpop.f32.mrb[0].mxu0
        %1691 = vmatprep.mubr.bf16.mxu0 0
        %1692 = vmatmul.mubr.bf16.gmra.mrb[0].mxu0 %v1621
        %v1693 = vpop.f32.mrb[0].mxu0
        %v1694 = vadd.f32 0.0, %v1693
        %v1695 = vpop.f32.mrb[0].mxu0
        %v1696 = vpop.f32.mrb[0].mxu0
        %v1697 = vadd.f32 0.0, %v1696
        %v1698 = vpop.f32.mrb[0].mxu0
        %1699 = vdwg.mxu0
        %v1700 = vsel %vm593, %v1670, -inf
        %v1701 = vsel %vm594, %v1673, -inf
        %v1702 = vsel %vm595, %v1678, -inf
        %v1703 = vsel %vm596, %v1681, -inf
        %v1704 = vsel %vm597, %v1686, -inf
        %v1705 = vsel %vm598, %v1689, -inf
        %v1706 = vsel %vm599, %v1694, -inf
        %v1707 = vsel %vm600, %v1697, -inf
        %v1708 = vsel %vm711, %v1700, -inf
        %1709 = vmax.xlane.f32.xlu0 %v1708
        %v1710 = vpop.xlane.xlu0 %1709
        %v1711 = vsel %vm711, %v1701, -inf
        %1712 = vmax.xlane.f32.xlu0 %v1711
        %v1713 = vpop.xlane.xlu0 %1712
        %v1714 = vsel %vm711, %v1702, -inf
        %1715 = vmax.xlane.f32.xlu0 %v1714
        %v1716 = vpop.xlane.xlu0 %1715
        %v1717 = vsel %vm711, %v1703, -inf
        %1718 = vmax.xlane.f32.xlu0 %v1717
        %v1719 = vpop.xlane.xlu0 %1718
        %v1720 = vsel %vm711, %v1704, -inf
        %1721 = vmax.xlane.f32.xlu0 %v1720
        %v1722 = vpop.xlane.xlu0 %1721
        %v1723 = vsel %vm711, %v1705, -inf
        %1724 = vmax.xlane.f32.xlu0 %v1723
        %v1725 = vpop.xlane.xlu0 %1724
        %v1726 = vsel %vm711, %v1706, -inf
        %1727 = vmax.xlane.f32.xlu0 %v1726
        %v1728 = vpop.xlane.xlu0 %1727
        %v1729 = vsel %vm711, %v1707, -inf
        %1730 = vmax.xlane.f32.xlu0 %v1729
        %v1731 = vpop.xlane.xlu0 %1730
        %v1732 = vsub.f32 %v1700, %v1710
        %v1733 = vsub.f32 %v1701, %v1713
        %v1734 = vsub.f32 %v1702, %v1716
        %v1735 = vsub.f32 %v1703, %v1719
        %v1736 = vsub.f32 %v1704, %v1722
        %v1737 = vsub.f32 %v1705, %v1725
        %v1738 = vsub.f32 %v1706, %v1728
        %v1739 = vsub.f32 %v1707, %v1731
        %v1740 = vmul.f32 %v1732, 1.442695
        %v1741 = vpow.pop %v1740
        %v1742 = vmul.f32 %v1733, 1.442695
        %v1743 = vpow.pop %v1742
        %v1744 = vmul.f32 %v1734, 1.442695
        %v1745 = vpow.pop %v1744
        %v1746 = vmul.f32 %v1735, 1.442695
        %v1747 = vpow.pop %v1746
        %v1748 = vmul.f32 %v1736, 1.442695
        %v1749 = vpow.pop %v1748
        %v1750 = vmul.f32 %v1737, 1.442695
        %v1751 = vpow.pop %v1750
        %v1752 = vmul.f32 %v1738, 1.442695
        %v1753 = vpow.pop %v1752
        %v1754 = vmul.f32 %v1739, 1.442695
        %v1755 = vpow.pop %v1754
        %v1756 = vsel %vm711, %v1741, 0.0
        %1757 = vadd.xlane.f32.xlu0 %v1756
        %v1758 = vpop.xlane.xlu0 %1757
        %v1759 = vsel %vm711, %v1743, 0.0
        %1760 = vadd.xlane.f32.xlu0 %v1759
        %v1761 = vpop.xlane.xlu0 %1760
        %v1762 = vsel %vm711, %v1745, 0.0
        %1763 = vadd.xlane.f32.xlu0 %v1762
        %v1764 = vpop.xlane.xlu0 %1763
        %v1765 = vsel %vm711, %v1747, 0.0
        %1766 = vadd.xlane.f32.xlu0 %v1765
        %v1767 = vpop.xlane.xlu0 %1766
        %v1768 = vsel %vm711, %v1749, 0.0
        %1769 = vadd.xlane.f32.xlu0 %v1768
        %v1770 = vpop.xlane.xlu0 %1769
        %v1771 = vsel %vm711, %v1751, 0.0
        %1772 = vadd.xlane.f32.xlu0 %v1771
        %v1773 = vpop.xlane.xlu0 %1772
        %v1774 = vsel %vm711, %v1753, 0.0
        %1775 = vadd.xlane.f32.xlu0 %v1774
        %v1776 = vpop.xlane.xlu0 %1775
        %v1777 = vsel %vm711, %v1755, 0.0
        %1778 = vadd.xlane.f32.xlu0 %v1777
        %v1779 = vpop.xlane.xlu0 %1778
        %v1780 = vrcp.pop %v1758
        %v1781 = vrcp.pop %v1761
        %v1782 = vrcp.pop %v1764
        %v1783 = vrcp.pop %v1767
        %v1784 = vrcp.pop %v1770
        %v1785 = vrcp.pop %v1773
        %v1786 = vrcp.pop %v1776
        %v1787 = vrcp.pop %v1779
        %v1788 = vmul.f32 %v1741, %v1780
        %v1789 = vmul.f32 %v1743, %v1781
        %v1790 = vmul.f32 %v1745, %v1782
        %v1791 = vmul.f32 %v1747, %v1783
        %v1792 = vmul.f32 %v1749, %v1784
        %v1793 = vmul.f32 %v1751, %v1785
        %v1794 = vmul.f32 %v1753, %v1786
        %v1795 = vmul.f32 %v1755, %v1787
        %v1796 = vpack.c.bf16 %v1789, %v1788
        %v1797 = vpack.c.bf16 %v1791, %v1790
        %v1798 = vpack.c.bf16 %v1793, %v1792
        %v1799 = vpack.c.bf16 %v1795, %v1794
        %1804 = vrot.lane.b32.xlu0 %v1583, 32
        %v1805 = vpop.permute.xlu0 %1804
        %1806 = vrot.lane.b32.xlu0 %v1584, 32
        %v1807 = vpop.permute.xlu0 %1806
        %1808 = vrot.lane.b32.xlu0 %v1585, 32
        %v1809 = vpop.permute.xlu0 %1808
        %1810 = vrot.lane.b32.xlu0 %v1586, 32
        %v1811 = vpop.permute.xlu0 %1810
        %v1817 = vsel %vm711, %v1796, 0
        %v1820 = vsel %vm711, %v1797, 0
        %v1823 = vsel %vm711, %v1798, 0
        %v1826 = vsel %vm711, %v1799, 0
        %1828 = vmatprep.subr.bf16.mxu0 0
        %1829 = vmatpush1.bf16.msra.mxu0 %v1805
        %1830 = vmatprep.subr.bf16.mxu0 0
        %1831 = vmatpush1.bf16.msra.mxu0 %v1807
        %1832 = vmatprep.subr.bf16.mxu0 0
        %1833 = vmatpush1.bf16.msra.mxu0 %v1809
        %1834 = vmatprep.subr.bf16.mxu0 0
        %1835 = vmatpush1.bf16.msra.mxu0 %v1811
        %1836 = vmatprep.subr.bf16.mxu0 0
        %1837 = vmatpush1.bf16.msra.mxu0 0
        %1838 = vmatprep.subr.bf16.mxu0 0
        %1839 = vmatpush1.bf16.msra.mxu0 0
        %1840 = vmatprep.subr.bf16.mxu0 0
        %1841 = vmatpush1.bf16.msra.mxu0 0
        %1842 = vmatprep.subr.bf16.mxu0 0
        %1843 = vmatpush1.bf16.msra.mxu0 0
        %1844 = vmatprep.subr.bf16.mxu0 0
        %1845 = vmatpush1.bf16.msra.mxu0 0
        %1846 = vmatprep.subr.bf16.mxu0 0
        %1847 = vmatpush1.bf16.msra.mxu0 0
        %1848 = vmatprep.subr.bf16.mxu0 0
        %1849 = vmatpush1.bf16.msra.mxu0 0
        %1850 = vmatprep.subr.bf16.mxu0 0
        %1851 = vmatpush1.bf16.msra.mxu0 0
        %1852 = vmatprep.subr.bf16.mxu0 0
        %1853 = vmatpush1.bf16.msra.mxu0 0
        %1854 = vmatprep.subr.bf16.mxu0 0
        %1855 = vmatpush1.bf16.msra.mxu0 0
        %1856 = vmatprep.subr.bf16.mxu0 0
        %1857 = vmatpush1.bf16.msra.mxu0 0
        %1858 = vmatprep.subr.bf16.mxu0 0
        %1859 = vmatpush1.bf16.msra.mxu0 0
        %1860 = vmatprep.mubr.bf16.mxu0 0
        %1861 = vmatmul.mubr.bf16.gmra.mrb[0].mxu0 %v1817
        %v1862 = vpop.f32.mrb[0].mxu0
        %v1863 = vadd.f32 0.0, %v1862
        %v1864 = vpop.f32.mrb[0].mxu0
        %v1865 = vpop.f32.mrb[0].mxu0
        %v1866 = vadd.f32 0.0, %v1865
        %v1867 = vpop.f32.mrb[0].mxu0
        %1868 = vmatprep.mubr.bf16.mxu0 0
        %1869 = vmatmul.mubr.bf16.gmra.mrb[0].mxu0 %v1820
        %v1870 = vpop.f32.mrb[0].mxu0
        %v1871 = vadd.f32 0.0, %v1870
        %v1872 = vpop.f32.mrb[0].mxu0
        %v1873 = vpop.f32.mrb[0].mxu0
        %v1874 = vadd.f32 0.0, %v1873
        %v1875 = vpop.f32.mrb[0].mxu0
        %1876 = vmatprep.mubr.bf16.mxu0 0
        %1877 = vmatmul.mubr.bf16.gmra.mrb[0].mxu0 %v1823
        %v1878 = vpop.f32.mrb[0].mxu0
        %v1879 = vadd.f32 0.0, %v1878
        %v1880 = vpop.f32.mrb[0].mxu0
        %v1881 = vpop.f32.mrb[0].mxu0
        %v1882 = vadd.f32 0.0, %v1881
        %v1883 = vpop.f32.mrb[0].mxu0
        %1884 = vmatprep.mubr.bf16.mxu0 0
        %1885 = vmatmul.mubr.bf16.gmra.mrb[0].mxu0 %v1826
        %v1886 = vpop.f32.mrb[0].mxu0
        %v1887 = vadd.f32 0.0, %v1886
        %v1888 = vpop.f32.mrb[0].mxu0
        %v1889 = vpop.f32.mrb[0].mxu0
        %v1890 = vadd.f32 0.0, %v1889
        %v1891 = vpop.f32.mrb[0].mxu0
        %1892 = vdwg.mxu0
        %v1893 = vpack.c.bf16 %v1866, %v1863
        %v1894 = vpack.c.bf16 %v1874, %v1871
        %v1895 = vpack.c.bf16 %v1882, %v1879
        %v1896 = vpack.c.bf16 %v1890, %v1887
        %1901 = vrot.lane.b32.xlu0 %v1893, 96
        %v1902 = vpop.permute.xlu0 %1901
        %1903 = vrot.lane.b32.xlu0 %v1894, 96
        %v1904 = vpop.permute.xlu0 %1903
        %1905 = vrot.lane.b32.xlu0 %v1895, 96
        %v1906 = vpop.permute.xlu0 %1905
        %1907 = vrot.lane.b32.xlu0 %v1896, 96
        %v1908 = vpop.permute.xlu0 %1907
        %vm1913 = vcmask 1048320
        %1914 = vst.msk [vmem:[#allocation3] sm:$0xff] %vm1913, %v1902
        %1915 = vst.msk [vmem:[#allocation3 + $0x8] sm:$0xff] %vm1913, %v1904
        %1916 = vst.msk [vmem:[#allocation3 + $0x10] sm:$0xff] %vm1913, %v1906
        %1917 = vst.msk [vmem:[#allocation3 + $0x18] sm:$0xff] %vm1913, %v1908
        %v1918 = vld [vmem:[#allocation3] sm:$0xff]
        %v1919 = vld [vmem:[#allocation3 + $0x8] sm:$0xff]
        %v1920 = vld [vmem:[#allocation3 + $0x10] sm:$0xff]
        %v1921 = vld [vmem:[#allocation3 + $0x18] sm:$0xff]
        %v1922 = vld [vmem:[#allocation9] sm:$0xf]
        %v1923 = vld [vmem:[#allocation9 + $0x4] sm:$0xf]
        %v1924 = vld [vmem:[#allocation9 + $0x8] sm:$0xf]
        %v1925 = vld [vmem:[#allocation9 + $0xc] sm:$0xf]
        %v1926 = vld [vmem:[#allocation9 + $0x10] sm:$0xf]
        %v1927 = vld [vmem:[#allocation9 + $0x14] sm:$0xf]
        %v1928 = vld [vmem:[#allocation9 + $0x18] sm:$0xf]
        %v1929 = vld [vmem:[#allocation9 + $0x1c] sm:$0xf]
        %v1930 = vld [vmem:[#allocation9 + $0x20] sm:$0xf]
        %v1931 = vld [vmem:[#allocation9 + $0x24] sm:$0xf]
        %v1932 = vld [vmem:[#allocation9 + $0x28] sm:$0xf]
        %v1933 = vld [vmem:[#allocation9 + $0x2c] sm:$0xf]
        %v1934 = vld [vmem:[#allocation9 + $0x30] sm:$0xf]
        %v1935 = vld [vmem:[#allocation9 + $0x34] sm:$0xf]
        %v1936 = vld [vmem:[#allocation9 + $0x38] sm:$0xf]
        %v1937 = vld [vmem:[#allocation9 + $0x3c] sm:$0xf]
        %v1938 = vld [vmem:[%s3] sm:$0x1]
        %v1940 = vlaneseq
        %v1941 = vshrl.u32 %v1940, 7
        %v1942 = vsub.s32 0, %v1941
        %v1943 = vrot.slane %v1938, %v1942
        %v1961 = vunpack.c.l.b16 %v1922
        %v1962 = vunpack.c.l.b16 %v1923
        %v1963 = vunpack.c.l.b16 %v1924
        %v1964 = vunpack.c.l.b16 %v1925
        %v1965 = vunpack.c.l.b16 %v1926
        %v1966 = vunpack.c.l.b16 %v1927
        %v1967 = vunpack.c.l.b16 %v1928
        %v1968 = vunpack.c.l.b16 %v1929
        %v1969 = vunpack.c.l.b16 %v1930
        %v1970 = vunpack.c.l.b16 %v1931
        %v1971 = vunpack.c.l.b16 %v1932
        %v1972 = vunpack.c.l.b16 %v1933
        %v1973 = vunpack.c.l.b16 %v1934
        %v1974 = vunpack.c.l.b16 %v1935
        %v1975 = vunpack.c.l.b16 %v1936
        %v1976 = vunpack.c.l.b16 %v1937
        %v1977 = vpack.c.b16 %v1962, %v1961
        %v1978 = vpack.c.b16 %v1964, %v1963
        %v1979 = vpack.c.b16 %v1966, %v1965
        %v1980 = vpack.c.b16 %v1968, %v1967
        %v1981 = vpack.c.b16 %v1970, %v1969
        %v1982 = vpack.c.b16 %v1972, %v1971
        %v1983 = vpack.c.b16 %v1974, %v1973
        %v1984 = vpack.c.b16 %v1976, %v1975
        %1993 = vmatprep.subr.bf16.mxu0 0
        %1994 = vmatpush1.bf16.msra.mxu0 %v1977
        %1995 = vmatprep.subr.bf16.mxu0 0
        %1996 = vmatpush1.bf16.msra.mxu0 %v1978
        %1997 = vmatprep.subr.bf16.mxu0 0
        %1998 = vmatpush1.bf16.msra.mxu0 %v1979
        %1999 = vmatprep.subr.bf16.mxu0 0
        %2000 = vmatpush1.bf16.msra.mxu0 %v1980
        %2001 = vmatprep.subr.bf16.mxu0 0
        %2002 = vmatpush1.bf16.msra.mxu0 %v1981
        %2003 = vmatprep.subr.bf16.mxu0 0
        %2004 = vmatpush1.bf16.msra.mxu0 %v1982
        %2005 = vmatprep.subr.bf16.mxu0 0
        %2006 = vmatpush1.bf16.msra.mxu0 %v1983
        %2007 = vmatprep.subr.bf16.mxu0 0
        %2008 = vmatpush1.bf16.msra.mxu0 %v1984
        %2009 = vmatprep.subr.bf16.mxu0 0
        %2010 = vmatpush1.bf16.msra.mxu0 0
        %2011 = vmatprep.subr.bf16.mxu0 0
        %2012 = vmatpush1.bf16.msra.mxu0 0
        %2013 = vmatprep.subr.bf16.mxu0 0
        %2014 = vmatpush1.bf16.msra.mxu0 0
        %2015 = vmatprep.subr.bf16.mxu0 0
        %2016 = vmatpush1.bf16.msra.mxu0 0
        %2017 = vmatprep.subr.bf16.mxu0 0
        %2018 = vmatpush1.bf16.msra.mxu0 0
        %2019 = vmatprep.subr.bf16.mxu0 0
        %2020 = vmatpush1.bf16.msra.mxu0 0
        %2021 = vmatprep.subr.bf16.mxu0 0
        %2022 = vmatpush1.bf16.msra.mxu0 0
        %2023 = vmatprep.subr.bf16.mxu0 0
        %2024 = vmatpush1.bf16.msra.mxu0 0
        %2025 = vmatprep.mubr.bf16.mxu0 0
        %2026 = vmatmul.mubr.bf16.gmra.mrb[0].mxu0 %v1918
        %v2027 = vpop.f32.mrb[0].mxu0
        %v2028 = vadd.f32 %v1943, %v2027
        %v2029 = vpop.f32.mrb[0].mxu0
        %v2030 = vpop.f32.mrb[0].mxu0
        %v2031 = vadd.f32 %v1943, %v2030
        %v2032 = vpop.f32.mrb[0].mxu0
        %2033 = vmatprep.mubr.bf16.mxu0 0
        %2034 = vmatmul.mubr.bf16.gmra.mrb[0].mxu0 %v1919
        %v2035 = vpop.f32.mrb[0].mxu0
        %v2036 = vadd.f32 %v1943, %v2035
        %v2037 = vpop.f32.mrb[0].mxu0
        %v2038 = vpop.f32.mrb[0].mxu0
        %v2039 = vadd.f32 %v1943, %v2038
        %v2040 = vpop.f32.mrb[0].mxu0
        %2041 = vmatprep.mubr.bf16.mxu0 0
        %2042 = vmatmul.mubr.bf16.gmra.mrb[0].mxu0 %v1920
        %v2043 = vpop.f32.mrb[0].mxu0
        %v2044 = vadd.f32 %v1943, %v2043
        %v2045 = vpop.f32.mrb[0].mxu0
        %v2046 = vpop.f32.mrb[0].mxu0
        %v2047 = vadd.f32 %v1943, %v2046
        %v2048 = vpop.f32.mrb[0].mxu0
        %2049 = vmatprep.mubr.bf16.mxu0 0
        %2050 = vmatmul.mubr.bf16.gmra.mrb[0].mxu0 %v1921
        %v2051 = vpop.f32.mrb[0].mxu0
        %v2052 = vadd.f32 %v1943, %v2051
        %v2053 = vpop.f32.mrb[0].mxu0
        %v2054 = vpop.f32.mrb[0].mxu0
        %v2055 = vadd.f32 %v1943, %v2054
        %v2056 = vpop.f32.mrb[0].mxu0
        %2057 = vdwg.mxu0
        %2058 = vst [vmem:[%s244] sm:$0xff] %v2028
        %2059 = vst [vmem:[%s244 + $0x8] sm:$0xff] %v2031
        %2060 = vst [vmem:[%s244 + $0x10] sm:$0xff] %v2036
        %2061 = vst [vmem:[%s244 + $0x18] sm:$0xff] %v2039
        %2062 = vst [vmem:[%s244 + $0x20] sm:$0xff] %v2044
        %2063 = vst [vmem:[%s244 + $0x28] sm:$0xff] %v2047
        %2064 = vst [vmem:[%s244 + $0x30] sm:$0xff] %v2052
        %2065 = vst [vmem:[%s244 + $0x38] sm:$0xff] %v2055
        %s2066 = sand.u32 %s119, 1
        %s2067 = scalar_lea.sflag [#allocation6], %s2066
        %s2068 = sand.u32 %s119, 1
        %s2069 = smul.addr %s2068, 64
        %s2070 = scalar_lea.vmem [#allocation10], %s2069
        // Predicated region
        $region49: #{tpu_custom_call.1} parent=35 // pred_check
          %p2071 = pneg %p129
        $region50: #{tpu_custom_call.1} parent=35 // pred_check_branch
          %2073 = sbr.rel (%p2071) target = $region52
        $region51: #{tpu_custom_call.1} parent=35 // pred_region
          %s2074 = smul.u32 8, %s22
          %s2076 = ssub.s32 1024, 1024
          %2077 = vsyncadd %s2067, %s2076
          %s2078 = smul.addr %s2074, 128
          %s2079 = scalar_lea.hbm %s4, %s2078
          %s2080 = sshll.u32 %s2070, 4
          %s2081 = int_to_ptr.vmem [resolvable:$true] %s2080
          %2086 = dma.vmem_to_hbm [thread:$0]  %s2081, 1024, %s2079, %s2067, 128, 128, 8
        $region52: #{tpu_custom_call.1} parent=35 // pred_fallthru
          _
      $region36: #{tpu_custom_call.1} parent=5 // pred_fallthru
        _
      %p2087 = scmp.le.s32.totalorder 2, %s17
      // Predicated region
      $region53: #{tpu_custom_call.1} parent=5 // pred_check
        %p2088 = pneg %p2087
      $region54: #{tpu_custom_call.1} parent=5 // pred_check_branch
        %2090 = sbr.rel (%p2088) target = $region56
      $region55: #{tpu_custom_call.1} parent=5 // pred_region
        %s2091 = ssub.s32 %s17, 2
        // Predicated region
        $region57: #{tpu_custom_call.1} parent=55 // pred_check
          %p2092 = pneg %p135
        $region58: #{tpu_custom_call.1} parent=55 // pred_check_branch
          %2094 = sbr.rel (%p2092) target = $region60
        $region59: #{tpu_custom_call.1} parent=55 // pred_region
          %s2095 = sand.u32 %s120, 1
          %s2096 = scalar_lea.sflag [#allocation6], %s2095
          %s2097 = sand.u32 %s120, 1
          %s2098 = smul.addr %s2097, 64
          %s2099 = scalar_lea.vmem [#allocation10], %s2098
          %2100 = dma.done %s2096, 1024
        $region60: #{tpu_custom_call.1} parent=55 // pred_fallthru
          _
      $region56: #{tpu_custom_call.1} parent=5 // pred_fallthru
        _
    $region6: #{tpu_custom_call.1} parent=1 // loop_footer
      %s21 = sadd.s32 1, %s17
    $region7: #{tpu_custom_call.1} parent=1 // loop_footer_branch
      %16 = sbr.rel target = $region3
    $region8: #{tpu_custom_call.1} parent=1 // loop_exit
      _
    %2101 = vsyncpa [#allocation5], 1
    %s2102 = scalar_lea.sflag [#allocation5], 1
    %2103 = vsyncpa %s2102, 1
    %2104 = vsyncpa [#allocation8], 1
    %2105 = vsyncpa [#allocation6], 1
    %s2106 = scalar_lea.sflag [#allocation6], 1
    %2107 = vsyncpa %s2106, 1

</llo_original>
